<compile_context>
chip_gen: v5e
topology: v5e:2x2
jax: 0.10.0
libtpu: 0.0.40
codegen_flags: <defaults>
</compile_context>

<pallas_src>
import jax
import jax.numpy as jnp
import numpy as np
from jax.experimental import pallas as pl
from jax.experimental.pallas import tpu as pltpu

EPS = 1e-5
DILATIONS = (1, 3, 5)  # dilation_rate = 2 * i + 1 for i = 0, 1, 2


# -----------------------------------------------------------------------------
# Pallas kernels
# -----------------------------------------------------------------------------
def _make_stage_kernel(with_prelu):
    """One fused matmul per row tile: the three dilated 3x3 convs, the 1x1
    'cat' conv and eval-mode BN are pre-folded into a single (27*C, nf) weight
    and a (1, nf) bias, optionally followed by PReLU."""
    if with_prelu:
        def kernel(p_ref, w_ref, b_ref, alpha_ref, out_ref):
            y = jnp.dot(p_ref[...], w_ref[...],
                        preferred_element_type=jnp.float32) + b_ref[...]
            out_ref[...] = jnp.where(y >= 0.0, y, y * alpha_ref[...])
    else:
        def kernel(p_ref, w_ref, b_ref, out_ref):
            out_ref[...] = jnp.dot(p_ref[...], w_ref[...],
                                   preferred_element_type=jnp.float32) + b_ref[...]
    return kernel


def _se_residual_kernel(u_ref, x_ref, w1t_ref, w2t_ref, out_ref):
    """Squeeze-and-excite (global avg pool -> fc -> relu -> fc -> sigmoid ->
    channel scale) + residual add.  One image per grid step."""
    u = u_ref[0]                                           # (H*W, C)
    hw = u.shape[0]
    # Global average pool on the MXU (ones-vector matmul) instead of a long
    # sublane reduction.
    ones = jnp.ones((1, hw), jnp.float32)
    z = jnp.dot(ones, u, preferred_element_type=jnp.float32) * (1.0 / hw)
    s = jnp.maximum(
        jnp.dot(z, w1t_ref[...], preferred_element_type=jnp.float32), 0.0)
    t = jnp.dot(s, w2t_ref[...], preferred_element_type=jnp.float32)
    g = 1.0 / (1.0 + jnp.exp(-t))                          # sigmoid gate, (1, C)
    out_ref[0] = x_ref[0] + g * u


# -----------------------------------------------------------------------------
# pallas_call wrappers
# -----------------------------------------------------------------------------
def _pick_tile_rows(n_rows, k, nf, budget_bytes=16 * 1024 * 1024):
    """Largest row tile (multiple of 8) whose double-buffered blocks fit the
    budget; keep >= 2 grid steps when possible (v7x has 2 TensorCores)."""
    tn = 8
    for cand in (2048, 1024, 512, 256, 128, 64, 32, 16, 8):
        need = 4 * (2 * cand * k + 2 * cand * nf + 2 * k * nf + 2 * nf)
        if need <= budget_bytes:
            tn = cand
            break
    n_pad8 = max(8, ((n_rows + 7) // 8) * 8)
    tn = min(tn, n_pad8)
    while pl.cdiv(n_rows, tn) < 2 and tn > 8:
        tn = max(8, (tn // 2) // 8 * 8)
    return tn


def _stage_call(p_cat, w_eff, b_eff, alpha=None):
    """y = p_cat @ w_eff + b_eff (+ PReLU), tiled over rows and padded up to a
    tile multiple instead of falling back to one giant block."""
    n_rows, k = p_cat.shape
    nf = w_eff.shape[1]
    tn = _pick_tile_rows(n_rows, k, nf)
    n_pad = pl.cdiv(n_rows, tn) * tn
    if n_pad != n_rows:
        p_cat = jnp.pad(p_cat, ((0, n_pad - n_rows), (0, 0)))

    in_specs = [
        pl.BlockSpec((tn, k), lambda i: (i, 0)),
        pl.BlockSpec((k, nf), lambda i: (0, 0)),
        pl.BlockSpec((1, nf), lambda i: (0, 0)),
    ]
    args = [p_cat, w_eff, b_eff]
    if alpha is not None:
        in_specs.append(pl.BlockSpec((1, nf), lambda i: (0, 0)))
        args.append(alpha)

    out = pl.pallas_call(
        _make_stage_kernel(with_prelu=alpha is not None),
        grid=(n_pad // tn,),
        in_specs=in_specs,
        out_specs=pl.BlockSpec((tn, nf), lambda i: (i, 0)),
        out_shape=jax.ShapeDtypeStruct((n_pad, nf), jnp.float32),
        compiler_params=pltpu.CompilerParams(
            dimension_semantics=("parallel",),
            vmem_limit_bytes=32 * 1024 * 1024),
    )(*args)
    return out[:n_rows] if n_pad != n_rows else out


def _se_call(u3, x3, w1t, w2t):
    B, HW, C = u3.shape
    hidden = w1t.shape[1]
    # TODO(synk): for very large H*W (esp. on v7x's 64 MiB VMEM) tile this over
    # HW with a pooled-sum accumulator + a second gating pass instead of
    # whole-image blocks.
    return pl.pallas_call(
        _se_residual_kernel,
        grid=(B,),
        in_specs=[
            pl.BlockSpec((1, HW, C), lambda b: (b, 0, 0)),
            pl.BlockSpec((1, HW, C), lambda b: (b, 0, 0)),
            pl.BlockSpec((C, hidden), lambda b: (0, 0)),
            pl.BlockSpec((hidden, C), lambda b: (0, 0)),
        ],
        out_specs=pl.BlockSpec((1, HW, C), lambda b: (b, 0, 0)),
        out_shape=jax.ShapeDtypeStruct((B, HW, C), jnp.float32),
        input_output_aliases={1: 0},   # residual input x3 reuses the output buffer
        compiler_params=pltpu.CompilerParams(
            dimension_semantics=("parallel",)),
    )(u3, x3, w1t, w2t)


# -----------------------------------------------------------------------------
# Glue: im2col, weight folding, full forward
# -----------------------------------------------------------------------------
def im2col_dilated3x3(x_nhwc, d):
    """SAME-padded, dilation-d 3x3 patches -> (B*H*W, 9*C), tap-major, channel-minor."""
    B, H, W, C = x_nhwc.shape
    xp = jnp.pad(x_nhwc, ((0, 0), (d, d), (d, d), (0, 0)))
    taps = [xp[:, ky * d:ky * d + H, kx * d:kx * d + W, :]
            for ky in range(3) for kx in range(3)]
    return jnp.concatenate(taps, axis=-1).reshape(B * H * W, 9 * C)


def conv3x3_weight_to_mat(w_oihw):
    """(Cout, Cin, 3, 3) -> (9*Cin, Cout), rows ordered (ky, kx, ci)."""
    Cout, Cin = w_oihw.shape[:2]
    return jnp.transpose(w_oihw, (2, 3, 1, 0)).reshape(9 * Cin, Cout)


def _fold_stage(conv_ws, conv_bs, wc_oc, mean, var, gamma, beta):
    """Fold branch 3x3 convs + 1x1 cat-conv + eval-mode BN into one weight/bias:
        W_eff = [W_1 @ Wc_1; W_2 @ Wc_2; W_3 @ Wc_3] * scale
        b_eff = (sum_k b_k @ Wc_k) * scale + beta - mean * scale
    All done once at trace time."""
    nf = wc_oc.shape[0]
    scale = gamma * jax.lax.rsqrt(var + EPS)                    # (nf,)
    w_parts = []
    b_acc = jnp.zeros((nf,), jnp.float32)
    for kk in range(3):
        wk = conv3x3_weight_to_mat(conv_ws[kk])                 # (9*Cin, nf)
        wck = wc_oc[:, kk * nf:(kk + 1) * nf].T                 # (nf, nf)
        w_parts.append(wk @ wck)
        b_acc = b_acc + conv_bs[kk] @ wck
    w_eff = jnp.concatenate(w_parts, axis=0) * scale[None, :]   # (27*Cin, nf)
    b_eff = b_acc * scale + beta - mean * scale
    return w_eff, b_eff[None, :]


def meta_ms_forward(x_nchw, P):
    B, Cin, H, W = x_nchw.shape
    nf = P['conv-s0-d1_w'].shape[0]
    assert Cin == nf, "residual connection requires in_channels == num_filters"
    x = jnp.transpose(x_nchw, (0, 2, 3, 1)).astype(jnp.float32)  # NHWC

    # ---- stage 0: 3 dilated convs -> cat -> 1x1 conv -> BN -> PReLU (fused) --
    p_cat = jnp.concatenate(
        [im2col_dilated3x3(x, d) for d in DILATIONS], axis=-1)   # (B*H*W, 27*C)
    w0, b0 = _fold_stage([P[f'conv-s0-d{i + 1}_w'] for i in range(3)],
                         [P[f'conv-s0-d{i + 1}_b'] for i in range(3)],
                         P['cat1_conv_w'][:, :, 0, 0],
                         P['cat1_bn_mean'], P['cat1_bn_var'],
                         P['cat1_bn_gamma'], P['cat1_bn_beta'])
    alpha = jnp.broadcast_to(P['cat1_prelu_w'].reshape(1, 1), (1, nf))
    t1 = _stage_call(p_cat, w0, b0, alpha=alpha)                 # (B*H*W, nf)

    # ---- stage 1: 3 dilated convs -> cat -> 1x1 conv -> BN (fused) -----------
    # NOTE: MetaMS.forward passes param_dict['conv-s0-d*'] to the s1 convs, but
    # with params=None that is None, so the s1 layers use their own weights.
    t1_img = t1.reshape(B, H, W, nf)
    q_cat = jnp.concatenate(
        [im2col_dilated3x3(t1_img, d) for d in DILATIONS], axis=-1)
    w1, b1 = _fold_stage([P[f'conv-s1-d{i + 1}_w'] for i in range(3)],
                         [P[f'conv-s1-d{i + 1}_b'] for i in range(3)],
                         P['catconv2_w'][:, :, 0, 0],
                         P['catbn2_mean'], P['catbn2_var'],
                         P['catbn2_gamma'], P['catbn2_beta'])
    u = _stage_call(q_cat, w1, b1, alpha=None)                   # (B*H*W, nf)

    # ---- SE block + residual --------------------------------------------------
    u3 = u.reshape(B, H * W, nf)
    x3 = x.reshape(B, H * W, Cin)
    out3 = _se_call(u3, x3, P['se_w1'].T, P['se_w2'].T)          # (B, H*W, nf)
    return jnp.transpose(out3.reshape(B, H, W, nf), (0, 3, 1, 2))  # back to NCHW


# -----------------------------------------------------------------------------
# Deterministic parameter init (shapes from MetaMS.__init__)
# -----------------------------------------------------------------------------
def init_params(key, in_channels, nf):
    hidden = nf // (nf // 4)  # MetaSEBlock(reduction=num_filters // 4)
    P = {}

    def kaiming(k, shape, fan_in):
        return jax.random.normal(k, shape, jnp.float32) * jnp.sqrt(2.0 / fan_in)

    keys = iter(jax.random.split(key, 16))
    for i in range(3):
        P[f'conv-s0-d{i + 1}_w'] = kaiming(next(keys), (nf, in_channels, 3, 3),
                                           in_channels * 9)
        P[f'conv-s0-d{i + 1}_b'] = jnp.zeros((nf,), jnp.float32)
        P[f'conv-s1-d{i + 1}_w'] = kaiming(next(keys), (nf, nf, 3, 3), nf * 9)
        P[f'conv-s1-d{i + 1}_b'] = jnp.zeros((nf,), jnp.float32)
    P['cat1_conv_w'] = kaiming(next(keys), (nf, 3 * nf, 1, 1), 3 * nf)
    P['cat1_bn_mean'] = jnp.zeros((nf,), jnp.float32)
    P['cat1_bn_var'] = jnp.ones((nf,), jnp.float32)
    P['cat1_bn_gamma'] = jnp.ones((nf,), jnp.float32)
    P['cat1_bn_beta'] = jnp.zeros((nf,), jnp.float32)
    P['cat1_prelu_w'] = jnp.full((1,), 0.25, jnp.float32)
    P['catconv2_w'] = kaiming(next(keys), (nf, 3 * nf, 1, 1), 3 * nf)
    P['catbn2_mean'] = jnp.zeros((nf,), jnp.float32)
    P['catbn2_var'] = jnp.ones((nf,), jnp.float32)
    P['catbn2_gamma'] = jnp.ones((nf,), jnp.float32)
    P['catbn2_beta'] = jnp.zeros((nf,), jnp.float32)
    P['se_w1'] = kaiming(next(keys), (hidden, nf), nf)
    P['se_w2'] = kaiming(next(keys), (nf, hidden), hidden)
    return P


# -----------------------------------------------------------------------------
# Pure-JAX reference (mirrors the PyTorch eval-mode forward, unfused)
# -----------------------------------------------------------------------------
def reference_forward(x_nchw, P):
    x = jnp.transpose(x_nchw, (0, 2, 3, 1)).astype(jnp.float32)

    def conv3(inp, w, b, d):
        y = jax.lax.conv_general_dilated(
            inp, jnp.transpose(w, (2, 3, 1, 0)),
            window_strides=(1, 1), padding=((d, d), (d, d)),
            rhs_dilation=(d, d),
            dimension_numbers=('NHWC', 'HWIO', 'NHWC'))
        return y + b[None, None, None, :]

    def bn(y, pre):
        return ((y - P[pre + '_mean']) * jax.lax.rsqrt(P[pre + '_var'] + EPS)
                * P[pre + '_gamma'] + P[pre + '_beta'])

    outs = [conv3(x, P[f'conv-s0-d{i + 1}_w'], P[f'conv-s0-d{i + 1}_b'], 2 * i + 1)
            for i in range(3)]
    y = jnp.einsum('bhwc,oc->bhwo', jnp.concatenate(outs, axis=-1),
                   P['cat1_conv_w'][:, :, 0, 0])
    y = bn(y, 'cat1_bn')
    a = P['cat1_prelu_w'][0]
    y = jnp.where(y >= 0, y, a * y)

    outs = [conv3(y, P[f'conv-s1-d{i + 1}_w'], P[f'conv-s1-d{i + 1}_b'], 2 * i + 1)
            for i in range(3)]
    u = jnp.einsum('bhwc,oc->bhwo', jnp.concatenate(outs, axis=-1),
                   P['catconv2_w'][:, :, 0, 0])
    u = bn(u, 'catbn2')

    z = jnp.mean(u, axis=(1, 2))
    s = jnp.maximum(z @ P['se_w1'].T, 0.0)
    g = jax.nn.sigmoid(s @ P['se_w2'].T)
    out = x + g[:, None, None, :] * u
    return jnp.transpose(out, (0, 3, 1, 2))


if __name__ == "__main__":
    B, C, H, W = 2, 8, 16, 16  # in_channels == num_filters (required by residual)
    key = jax.random.PRNGKey(0)
    kx, kp = jax.random.split(key)
    x = jax.random.normal(kx, (B, C, H, W), jnp.float32)
    P = init_params(kp, in_channels=C, nf=C)

    out = jax.jit(meta_ms_forward)(x, P)
    out = jax.block_until_ready(out)

    ref = reference_forward(x, P)
    np.testing.assert_allclose(np.asarray(out), np.asarray(ref),
                               rtol=1e-3, atol=1e-4)
    print("KERNEL_OK")
</pallas_src>

<mosaic_0001>
module attributes {stable_mosaic.version = 11 : i64} {
  func.func @kernel(%arg0: i32, %arg1: memref<256x216xf32, #tpu.memory_space<vmem>>, %arg2: memref<216x8xf32, #tpu.memory_space<vmem>>, %arg3: memref<1x8xf32, #tpu.memory_space<vmem>>, %arg4: memref<1x8xf32, #tpu.memory_space<vmem>>, %arg5: memref<256x8xf32, #tpu.memory_space<vmem>>) attributes {dimension_semantics = [#tpu.dimension_semantics<parallel>], iteration_bounds = array<i64: 2>, scalar_prefetch = 0 : i64, scratch_operands = 0 : i64, tpu.core_type = #tpu.core_type<tc>, window_params = [{transform_indices = @transform_0, window_bounds = array<i64: 256, 216>}, {pipeline_mode = #tpu.pipeline_mode<synchronous>, transform_indices = @transform_1, window_bounds = array<i64: 216, 8>}, {pipeline_mode = #tpu.pipeline_mode<synchronous>, transform_indices = @transform_2, window_bounds = array<i64: 1, 8>}, {pipeline_mode = #tpu.pipeline_mode<synchronous>, transform_indices = @transform_3, window_bounds = array<i64: 1, 8>}, {transform_indices = @transform_4, window_bounds = array<i64: 256, 8>}]} {
    %c0 = arith.constant 0 : index
    %c0_0 = arith.constant 0 : index
    %0 = vector.load %arg1[%c0, %c0_0] : memref<256x216xf32, #tpu.memory_space<vmem>>, vector<256x216xf32>
    %c0_1 = arith.constant 0 : index
    %c0_2 = arith.constant 0 : index
    %1 = vector.load %arg2[%c0_1, %c0_2] : memref<216x8xf32, #tpu.memory_space<vmem>>, vector<216x8xf32>
    %cst = arith.constant dense<0.000000e+00> : vector<256x8xf32>
    %2 = tpu.matmul %0, %1, %cst {dimension_numbers = #tpu.dot_dimension_numbers<[1], [0], [0], [1], [0, 0, 1, 1], [], []>} : vector<256x216xf32>, vector<216x8xf32>, vector<256x8xf32> -> vector<256x8xf32>
    %c0_3 = arith.constant 0 : index
    %c0_4 = arith.constant 0 : index
    %3 = vector.load %arg3[%c0_3, %c0_4] : memref<1x8xf32, #tpu.memory_space<vmem>>, vector<1x8xf32>
    %4 = vector.broadcast %3 : vector<1x8xf32> to vector<256x8xf32>
    %5 = arith.addf %2, %4 : vector<256x8xf32>
    %cst_5 = arith.constant 0.000000e+00 : f32
    %6 = vector.broadcast %cst_5 : f32 to vector<256x8xf32>
    %7 = arith.cmpf oge, %5, %6 : vector<256x8xf32>
    %c0_6 = arith.constant 0 : index
    %c0_7 = arith.constant 0 : index
    %8 = vector.load %arg4[%c0_6, %c0_7] : memref<1x8xf32, #tpu.memory_space<vmem>>, vector<1x8xf32>
    %9 = vector.broadcast %8 : vector<1x8xf32> to vector<256x8xf32>
    %10 = arith.mulf %5, %9 : vector<256x8xf32>
    %11 = arith.select %7, %5, %10 : vector<256x8xi1>, vector<256x8xf32>
    %c0_8 = arith.constant 0 : index
    %c0_9 = arith.constant 0 : index
    %12 = vector.load %arg5[%c0_8, %c0_9] : memref<256x8xf32, #tpu.memory_space<vmem>>, vector<256x8xf32>
    tpu.vector_store %arg5[%c0_8, %c0_9], %11 {strides = array<i32>} : memref<256x8xf32, #tpu.memory_space<vmem>>, vector<256x8xf32>,
    return
  }
  func.func @transform_0(%arg0: i32) -> (i32, i32) {
    %c0_i32 = arith.constant 0 : i32
    %c0_i32_0 = arith.constant 0 : i32
    return %arg0, %c0_i32 : i32, i32
  }
  func.func @transform_1(%arg0: i32) -> (i32, i32) {
    %c0_i32 = arith.constant 0 : i32
    %c0_i32_0 = arith.constant 0 : i32
    %c0_i32_1 = arith.constant 0 : i32
    return %c0_i32, %c0_i32_0 : i32, i32
  }
  func.func @transform_2(%arg0: i32) -> (i32, i32) {
    %c0_i32 = arith.constant 0 : i32
    %c0_i32_0 = arith.constant 0 : i32
    %c0_i32_1 = arith.constant 0 : i32
    return %c0_i32, %c0_i32_0 : i32, i32
  }
  func.func @transform_3(%arg0: i32) -> (i32, i32) {
    %c0_i32 = arith.constant 0 : i32
    %c0_i32_0 = arith.constant 0 : i32
    %c0_i32_1 = arith.constant 0 : i32
    return %c0_i32, %c0_i32_0 : i32, i32
  }
  func.func @transform_4(%arg0: i32) -> (i32, i32) {
    %c0_i32 = arith.constant 0 : i32
    %c0_i32_0 = arith.constant 0 : i32
    return %arg0, %c0_i32 : i32, i32
  }
}

module attributes {stable_mosaic.version = 11 : i64} {
  func.func @kernel(%arg0: i32, %arg1: memref<256x216xf32, #tpu.memory_space<vmem>>, %arg2: memref<216x8xf32, #tpu.memory_space<vmem>>, %arg3: memref<1x8xf32, #tpu.memory_space<vmem>>, %arg4: memref<256x8xf32, #tpu.memory_space<vmem>>) attributes {dimension_semantics = [#tpu.dimension_semantics<parallel>], iteration_bounds = array<i64: 2>, scalar_prefetch = 0 : i64, scratch_operands = 0 : i64, tpu.core_type = #tpu.core_type<tc>, window_params = [{transform_indices = @transform_0, window_bounds = array<i64: 256, 216>}, {pipeline_mode = #tpu.pipeline_mode<synchronous>, transform_indices = @transform_1, window_bounds = array<i64: 216, 8>}, {pipeline_mode = #tpu.pipeline_mode<synchronous>, transform_indices = @transform_2, window_bounds = array<i64: 1, 8>}, {transform_indices = @transform_3, window_bounds = array<i64: 256, 8>}]} {
    %c0 = arith.constant 0 : index
    %c0_0 = arith.constant 0 : index
    %0 = vector.load %arg1[%c0, %c0_0] : memref<256x216xf32, #tpu.memory_space<vmem>>, vector<256x216xf32>
    %c0_1 = arith.constant 0 : index
    %c0_2 = arith.constant 0 : index
    %1 = vector.load %arg2[%c0_1, %c0_2] : memref<216x8xf32, #tpu.memory_space<vmem>>, vector<216x8xf32>
    %cst = arith.constant dense<0.000000e+00> : vector<256x8xf32>
    %2 = tpu.matmul %0, %1, %cst {dimension_numbers = #tpu.dot_dimension_numbers<[1], [0], [0], [1], [0, 0, 1, 1], [], []>} : vector<256x216xf32>, vector<216x8xf32>, vector<256x8xf32> -> vector<256x8xf32>
    %c0_3 = arith.constant 0 : index
    %c0_4 = arith.constant 0 : index
    %3 = vector.load %arg3[%c0_3, %c0_4] : memref<1x8xf32, #tpu.memory_space<vmem>>, vector<1x8xf32>
    %4 = vector.broadcast %3 : vector<1x8xf32> to vector<256x8xf32>
    %5 = arith.addf %2, %4 : vector<256x8xf32>
    %c0_5 = arith.constant 0 : index
    %c0_6 = arith.constant 0 : index
    %6 = vector.load %arg4[%c0_5, %c0_6] : memref<256x8xf32, #tpu.memory_space<vmem>>, vector<256x8xf32>
    tpu.vector_store %arg4[%c0_5, %c0_6], %5 {strides = array<i32>} : memref<256x8xf32, #tpu.memory_space<vmem>>, vector<256x8xf32>,
    return
  }
  func.func @transform_0(%arg0: i32) -> (i32, i32) {
    %c0_i32 = arith.constant 0 : i32
    %c0_i32_0 = arith.constant 0 : i32
    return %arg0, %c0_i32 : i32, i32
  }
  func.func @transform_1(%arg0: i32) -> (i32, i32) {
    %c0_i32 = arith.constant 0 : i32
    %c0_i32_0 = arith.constant 0 : i32
    %c0_i32_1 = arith.constant 0 : i32
    return %c0_i32, %c0_i32_0 : i32, i32
  }
  func.func @transform_2(%arg0: i32) -> (i32, i32) {
    %c0_i32 = arith.constant 0 : i32
    %c0_i32_0 = arith.constant 0 : i32
    %c0_i32_1 = arith.constant 0 : i32
    return %c0_i32, %c0_i32_0 : i32, i32
  }
  func.func @transform_3(%arg0: i32) -> (i32, i32) {
    %c0_i32 = arith.constant 0 : i32
    %c0_i32_0 = arith.constant 0 : i32
    return %arg0, %c0_i32 : i32, i32
  }
}

module attributes {stable_mosaic.version = 11 : i64} {
  func.func @_se_residual_kernel(%arg0: i32, %arg1: memref<1x256x8xf32, #tpu.memory_space<vmem>>, %arg2: memref<1x256x8xf32, #tpu.memory_space<vmem>>, %arg3: memref<8x4xf32, #tpu.memory_space<vmem>>, %arg4: memref<4x8xf32, #tpu.memory_space<vmem>>, %arg5: memref<1x256x8xf32, #tpu.memory_space<vmem>>) attributes {dimension_semantics = [#tpu.dimension_semantics<parallel>], iteration_bounds = array<i64: 2>, scalar_prefetch = 0 : i64, scratch_operands = 0 : i64, tpu.core_type = #tpu.core_type<tc>, window_params = [{transform_indices = @transform_0, window_bounds = array<i64: 1, 256, 8>}, {transform_indices = @transform_1, window_bounds = array<i64: 1, 256, 8>}, {pipeline_mode = #tpu.pipeline_mode<synchronous>, transform_indices = @transform_2, window_bounds = array<i64: 8, 4>}, {pipeline_mode = #tpu.pipeline_mode<synchronous>, transform_indices = @transform_3, window_bounds = array<i64: 4, 8>}, {transform_indices = @transform_4, window_bounds = array<i64: 1, 256, 8>}]} {
    %c0 = arith.constant 0 : index
    %c0_0 = arith.constant 0 : index
    %c0_1 = arith.constant 0 : index
    %0 = vector.load %arg1[%c0, %c0_0, %c0_1] : memref<1x256x8xf32, #tpu.memory_space<vmem>>, vector<1x256x8xf32>
    %1 = vector.shape_cast %0 : vector<1x256x8xf32> to vector<256x8xf32>
    %cst = arith.constant 1.000000e+00 : f32
    %2 = vector.broadcast %cst : f32 to vector<1x256xf32>
    %cst_2 = arith.constant dense<0.000000e+00> : vector<1x8xf32>
    %3 = tpu.matmul %2, %1, %cst_2 {dimension_numbers = #tpu.dot_dimension_numbers<[1], [0], [0], [1], [0, 0, 1, 1], [], []>} : vector<1x256xf32>, vector<256x8xf32>, vector<1x8xf32> -> vector<1x8xf32>
    %cst_3 = arith.constant 3.906250e-03 : f32
    %4 = vector.broadcast %cst_3 : f32 to vector<1x8xf32>
    %5 = arith.mulf %3, %4 : vector<1x8xf32>
    %c0_4 = arith.constant 0 : index
    %c0_5 = arith.constant 0 : index
    %6 = vector.load %arg3[%c0_4, %c0_5] : memref<8x4xf32, #tpu.memory_space<vmem>>, vector<8x4xf32>
    %cst_6 = arith.constant dense<0.000000e+00> : vector<1x4xf32>
    %7 = tpu.matmul %5, %6, %cst_6 {dimension_numbers = #tpu.dot_dimension_numbers<[1], [0], [0], [1], [0, 0, 1, 1], [], []>} : vector<1x8xf32>, vector<8x4xf32>, vector<1x4xf32> -> vector<1x4xf32>
    %cst_7 = arith.constant 0.000000e+00 : f32
    %8 = vector.broadcast %cst_7 : f32 to vector<1x4xf32>
    %9 = arith.maximumf %7, %8 : vector<1x4xf32>
    %c0_8 = arith.constant 0 : index
    %c0_9 = arith.constant 0 : index
    %10 = vector.load %arg4[%c0_8, %c0_9] : memref<4x8xf32, #tpu.memory_space<vmem>>, vector<4x8xf32>
    %cst_10 = arith.constant dense<0.000000e+00> : vector<1x8xf32>
    %11 = tpu.matmul %9, %10, %cst_10 {dimension_numbers = #tpu.dot_dimension_numbers<[1], [0], [0], [1], [0, 0, 1, 1], [], []>} : vector<1x4xf32>, vector<4x8xf32>, vector<1x8xf32> -> vector<1x8xf32>
    %cst_11 = arith.constant 0.000000e+00 : f32
    %12 = vector.broadcast %cst_11 : f32 to vector<1x8xf32>
    %13 = arith.subf %12, %11 : vector<1x8xf32>
    %14 = math.exp %13 : vector<1x8xf32>
    %cst_12 = arith.constant 1.000000e+00 : f32
    %15 = vector.broadcast %cst_12 : f32 to vector<1x8xf32>
    %16 = arith.addf %15, %14 : vector<1x8xf32>
    %cst_13 = arith.constant 1.000000e+00 : f32
    %17 = vector.broadcast %cst_13 : f32 to vector<1x8xf32>
    %18 = arith.divf %17, %16 : vector<1x8xf32>
    %c0_14 = arith.constant 0 : index
    %c0_15 = arith.constant 0 : index
    %c0_16 = arith.constant 0 : index
    %19 = vector.load %arg2[%c0_14, %c0_15, %c0_16] : memref<1x256x8xf32, #tpu.memory_space<vmem>>, vector<1x256x8xf32>
    %20 = vector.shape_cast %19 : vector<1x256x8xf32> to vector<256x8xf32>
    %21 = vector.broadcast %18 : vector<1x8xf32> to vector<256x8xf32>
    %22 = arith.mulf %21, %1 : vector<256x8xf32>
    %23 = arith.addf %20, %22 : vector<256x8xf32>
    %c0_17 = arith.constant 0 : index
    %c0_18 = arith.constant 0 : index
    %c0_19 = arith.constant 0 : index
    %24 = vector.load %arg5[%c0_17, %c0_18, %c0_19] : memref<1x256x8xf32, #tpu.memory_space<vmem>>, vector<1x256x8xf32>
    %25 = vector.shape_cast %24 : vector<1x256x8xf32> to vector<256x8xf32>
    %26 = vector.shape_cast %23 : vector<256x8xf32> to vector<1x256x8xf32>
    tpu.vector_store %arg5[%c0_17, %c0_18, %c0_19], %26 {strides = array<i32>} : memref<1x256x8xf32, #tpu.memory_space<vmem>>, vector<1x256x8xf32>,
    return
  }
  func.func @transform_0(%arg0: i32) -> (i32, i32, i32) {
    %c0_i32 = arith.constant 0 : i32
    %c0_i32_0 = arith.constant 0 : i32
    %c0_i32_1 = arith.constant 0 : i32
    return %arg0, %c0_i32, %c0_i32_0 : i32, i32, i32
  }
  func.func @transform_1(%arg0: i32) -> (i32, i32, i32) {
    %c0_i32 = arith.constant 0 : i32
    %c0_i32_0 = arith.constant 0 : i32
    %c0_i32_1 = arith.constant 0 : i32
    return %arg0, %c0_i32, %c0_i32_0 : i32, i32, i32
  }
  func.func @transform_2(%arg0: i32) -> (i32, i32) {
    %c0_i32 = arith.constant 0 : i32
    %c0_i32_0 = arith.constant 0 : i32
    %c0_i32_1 = arith.constant 0 : i32
    return %c0_i32, %c0_i32_0 : i32, i32
  }
  func.func @transform_3(%arg0: i32) -> (i32, i32) {
    %c0_i32 = arith.constant 0 : i32
    %c0_i32_0 = arith.constant 0 : i32
    %c0_i32_1 = arith.constant 0 : i32
    return %c0_i32, %c0_i32_0 : i32, i32
  }
  func.func @transform_4(%arg0: i32) -> (i32, i32, i32) {
    %c0_i32 = arith.constant 0 : i32
    %c0_i32_0 = arith.constant 0 : i32
    %c0_i32_1 = arith.constant 0 : i32
    return %arg0, %c0_i32, %c0_i32_0 : i32, i32, i32
  }
}

</mosaic_0001>

<llo_original>
// kernel: meta_ms_forward.3
$region0: #{meta_ms_forward.3}
  #allocation0 [shape = 'u32[]', space=smem, size = 0x4, offset = 0x4, fixed_abs, tag = 'smem constant byte address 0x4 - core index']
  #allocation1 [shape = 'u32[72,128]{1,0:T(1,128)}', space=vmem, size = 0x9000, scoped, tag = 'internal scratch']
  %s0 = inlined_call_operand.vmem [shape: f32[512,216], index: 0, kind: input, shape index: {}]
  %s1 = inlined_call_operand.vmem [shape: f32[216,8], index: 1, kind: input, shape index: {}]
  %s2 = inlined_call_operand.vmem [shape: f32[1,8], index: 2, kind: input, shape index: {}]
  %s3 = inlined_call_operand.vmem [shape: f32[1,8], index: 3, kind: input, shape index: {}]
  %s4 = inlined_call_operand.vmem [shape: f32[512,8], index: 4, kind: output, shape index: {}]
  %s5 = sld [smem:[#allocation0]]
  $region49: #{meta_ms_forward.3} parent=0
    _
  %s7 = ssub.s32 1, %s5
  %s8 = scalar_select 0, %s7, %s5
  loop: start=0, step=1, limit=4
  $region2: #{meta_ms_forward.3} parent=0 // loop_pre_header
    _
  $region3: #{meta_ms_forward.3} parent=0 // loop_header
    %s10 = sphi 0, %s14
    %p11 = scmp.ge.s32.totalorder %s10, 4
    %s20 = sphi 0, %s22
    %s23 = sphi 0, %s20
    %s24 = sphi 0, %s23
    %s40 = sphi 0, %s24
    %s44 = sphi 0, %s44
    %s46 = sphi 0, %s44
    %s47 = sphi 0, %s46
    %s61 = sphi 0, %s47
    %s65 = sphi 0, %s65
    %s67 = sphi 0, %s65
    %s68 = sphi 0, %s67
    %s82 = sphi 0, %s68
    %s86 = sphi 0, %s86
    %s88 = sphi 0, %s86
    %s89 = sphi 0, %s88
    %s103 = sphi 0, %s89
    %s109 = sphi 0, %s111
    %s112 = sphi 0, %s109
    %s113 = sphi 0, %s112
    %s129 = sphi 0, %s113
  $region4: #{meta_ms_forward.3} parent=0 // loop_header_branch
    %13 = sbr.rel (%p11) target = $region8
  $region5: #{meta_ms_forward.3} parent=0 // loop_body
    %s15 = ssub.s32 %s10, 1
    %s16 = ssub.s32 %s10, 2
    %s17 = sadd.s32 %s10, 1
    %s18 = ssub.s32 %s10, %s17
    %p19 = scmp.eq.s32.totalorder %s18, 0
    %s21 = sadd.s32 %s20, 1
    %s22 = scalar_select %p19, %s20, %s21
    %p25 = pneg %p19
    %p26 = scmp.eq.s32.totalorder %s10, 1
    %p27 = por %p25, %p26
    %p28 = scmp.ne.s32.totalorder %s20, %s23
    %p29 = scmp.eq.s32.totalorder %s10, 0
    %p30 = por %p28, %p29
    %p31 = scmp.ne.s32.totalorder %s20, %s23
    %p32 = scmp.eq.s32.totalorder %s15, 1
    %p33 = por %p31, %p32
    %p34 = scmp.ne.s32.totalorder %s23, %s24
    %p35 = scmp.eq.s32.totalorder %s15, 0
    %p36 = por %p34, %p35
    %p37 = scmp.ne.s32.totalorder %s23, %s24
    %p38 = scmp.eq.s32.totalorder %s16, 1
    %p39 = por %p37, %p38
    %p41 = scmp.ne.s32.totalorder %s24, %s40
    %p42 = scmp.eq.s32.totalorder %s16, 0
    %p43 = por %p41, %p42
    %s45 = sadd.s32 %s44, 1
    %p48 = scmp.eq.s32.totalorder %s10, 1
    %p49 = scmp.ne.s32.totalorder %s44, %s46
    %p50 = scmp.eq.s32.totalorder %s10, 0
    %p51 = por %p49, %p50
    %p52 = scmp.ne.s32.totalorder %s44, %s46
    %p53 = scmp.eq.s32.totalorder %s15, 1
    %p54 = por %p52, %p53
    %p55 = scmp.ne.s32.totalorder %s46, %s47
    %p56 = scmp.eq.s32.totalorder %s15, 0
    %p57 = por %p55, %p56
    %p58 = scmp.ne.s32.totalorder %s46, %s47
    %p59 = scmp.eq.s32.totalorder %s16, 1
    %p60 = por %p58, %p59
    %p62 = scmp.ne.s32.totalorder %s47, %s61
    %p63 = scmp.eq.s32.totalorder %s16, 0
    %p64 = por %p62, %p63
    %s66 = sadd.s32 %s65, 1
    %p69 = scmp.eq.s32.totalorder %s10, 1
    %p70 = scmp.ne.s32.totalorder %s65, %s67
    %p71 = scmp.eq.s32.totalorder %s10, 0
    %p72 = por %p70, %p71
    %p73 = scmp.ne.s32.totalorder %s65, %s67
    %p74 = scmp.eq.s32.totalorder %s15, 1
    %p75 = por %p73, %p74
    %p76 = scmp.ne.s32.totalorder %s67, %s68
    %p77 = scmp.eq.s32.totalorder %s15, 0
    %p78 = por %p76, %p77
    %p79 = scmp.ne.s32.totalorder %s67, %s68
    %p80 = scmp.eq.s32.totalorder %s16, 1
    %p81 = por %p79, %p80
    %p83 = scmp.ne.s32.totalorder %s68, %s82
    %p84 = scmp.eq.s32.totalorder %s16, 0
    %p85 = por %p83, %p84
    %s87 = sadd.s32 %s86, 1
    %p90 = scmp.eq.s32.totalorder %s10, 1
    %p91 = scmp.ne.s32.totalorder %s86, %s88
    %p92 = scmp.eq.s32.totalorder %s10, 0
    %p93 = por %p91, %p92
    %p94 = scmp.ne.s32.totalorder %s86, %s88
    %p95 = scmp.eq.s32.totalorder %s15, 1
    %p96 = por %p94, %p95
    %p97 = scmp.ne.s32.totalorder %s88, %s89
    %p98 = scmp.eq.s32.totalorder %s15, 0
    %p99 = por %p97, %p98
    %p100 = scmp.ne.s32.totalorder %s88, %s89
    %p101 = scmp.eq.s32.totalorder %s16, 1
    %p102 = por %p100, %p101
    %p104 = scmp.ne.s32.totalorder %s89, %s103
    %p105 = scmp.eq.s32.totalorder %s16, 0
    %p106 = por %p104, %p105
    %s107 = ssub.s32 %s10, %s17
    %p108 = scmp.eq.s32.totalorder %s107, 0
    %s110 = sadd.s32 %s109, 1
    %s111 = scalar_select %p108, %s109, %s110
    %p114 = pneg %p108
    %p115 = scmp.eq.s32.totalorder %s10, 1
    %p116 = por %p114, %p115
    %p117 = scmp.ne.s32.totalorder %s109, %s112
    %p118 = scmp.eq.s32.totalorder %s10, 0
    %p119 = por %p117, %p118
    %p120 = scmp.ne.s32.totalorder %s109, %s112
    %p121 = scmp.eq.s32.totalorder %s15, 1
    %p122 = por %p120, %p121
    %p123 = scmp.ne.s32.totalorder %s112, %s113
    %p124 = scmp.eq.s32.totalorder %s15, 0
    %p125 = por %p123, %p124
    %p126 = scmp.ne.s32.totalorder %s112, %s113
    %p127 = scmp.eq.s32.totalorder %s16, 1
    %p128 = por %p126, %p127
    %p130 = scmp.ne.s32.totalorder %s113, %s129
    %p131 = scmp.eq.s32.totalorder %s16, 0
    %p132 = por %p130, %p131
    %p133 = scmp.le.s32.totalorder 1, %s10
    %p134 = scmp.lt.s32.totalorder %s10, 3
    %p135 = pnand %p133, %p134
    %p136 = pneg %p135
    // Predicated region
    $region9: #{meta_ms_forward.3} parent=5 // pred_check
      _
    $region10: #{meta_ms_forward.3} parent=5 // pred_check_branch
      %138 = sbr.rel (%p135) target = $region12
    $region11: #{meta_ms_forward.3} parent=5 // pred_region
      %s139 = ssub.s32 %s10, 1
      // Predicated region
      $region13: #{meta_ms_forward.3} parent=11 // pred_check
        %p140 = pneg %p57
      $region14: #{meta_ms_forward.3} parent=11 // pred_check_branch
        %142 = sbr.rel (%p140) target = $region16
      $region15: #{meta_ms_forward.3} parent=11 // pred_region
        _
      $region16: #{meta_ms_forward.3} parent=11 // pred_fallthru
        _
      // Predicated region
      $region17: #{meta_ms_forward.3} parent=11 // pred_check
        %p143 = pneg %p78
      $region18: #{meta_ms_forward.3} parent=11 // pred_check_branch
        %145 = sbr.rel (%p143) target = $region20
      $region19: #{meta_ms_forward.3} parent=11 // pred_region
        _
      $region20: #{meta_ms_forward.3} parent=11 // pred_fallthru
        _
      // Predicated region
      $region21: #{meta_ms_forward.3} parent=11 // pred_check
        %p146 = pneg %p99
      $region22: #{meta_ms_forward.3} parent=11 // pred_check_branch
        %148 = sbr.rel (%p146) target = $region24
      $region23: #{meta_ms_forward.3} parent=11 // pred_region
        _
      $region24: #{meta_ms_forward.3} parent=11 // pred_fallthru
        _
    $region12: #{meta_ms_forward.3} parent=5 // pred_fallthru
      _
    %p149 = scmp.lt.s32.totalorder %s10, 2
    // Predicated region
    $region25: #{meta_ms_forward.3} parent=5 // pred_check
      %p150 = pneg %p149
    $region26: #{meta_ms_forward.3} parent=5 // pred_check_branch
      %152 = sbr.rel (%p150) target = $region28
    $region27: #{meta_ms_forward.3} parent=5 // pred_region
      // Predicated region
      $region29: #{meta_ms_forward.3} parent=27 // pred_check
        %p153 = pneg %p30
      $region30: #{meta_ms_forward.3} parent=27 // pred_check_branch
        %155 = sbr.rel (%p153) target = $region32
      $region31: #{meta_ms_forward.3} parent=27 // pred_region
        %s156 = smul.u32 32, %s10
        %p157 = scmp.lt.s32.totalorder %s156, 63
        %s158 = scalar_select %p157, %s156, 63
        %s159 = smul.addr %s158, 2
        %s160 = smul.addr %s159, 8
        %s161 = scalar_lea.vmem %s0, %s160
        %s162 = smul.u32 32, %s10
      $region32: #{meta_ms_forward.3} parent=27 // pred_fallthru
        _
    $region28: #{meta_ms_forward.3} parent=5 // pred_fallthru
      _
    %p163 = scmp.le.s32.totalorder 1, %s10
    %p164 = scmp.lt.s32.totalorder %s10, 3
    %p165 = pnand %p163, %p164
    %p166 = pneg %p165
    // Predicated region
    $region33: #{meta_ms_forward.3} parent=5 // pred_check
      _
    $region34: #{meta_ms_forward.3} parent=5 // pred_check_branch
      %168 = sbr.rel (%p165) target = $region36
    $region35: #{meta_ms_forward.3} parent=5 // pred_region
      %s169 = ssub.s32 %s10, 1
      %s170 = smul.u32 32, %s15
      %p171 = scmp.lt.s32.totalorder %s170, 63
      %s172 = scalar_select %p171, %s170, 63
      %s173 = smul.addr %s172, 2
      %s174 = smul.addr %s173, 8
      %s175 = scalar_lea.vmem %s0, %s174
      %p176 = pneg %p36
      %p177 = pneg %p33
      %p178 = pneg %p57
      %p179 = pneg %p54
      %p180 = pneg %p78
      %p181 = pneg %p75
      %p182 = pneg %p99
      %p183 = pneg %p96
      %p184 = pneg %p125
      %p185 = pneg %p122
      %s186 = smul.u32 32, %s15
      %p187 = scmp.lt.s32.totalorder %s186, 63
      %s188 = scalar_select %p187, %s186, 63
      %s189 = smul.addr %s188, 8
      %s190 = scalar_lea.vmem %s4, %s189
      %s191 = smul.u32 32, %s15
      %p192 = scmp.lt.s32.totalorder %s191, 63
      %s193 = scalar_select %p192, %s191, 63
      %s194 = smul.addr %s193, 2
      %s195 = smul.addr %s194, 8
      %s196 = scalar_lea.vmem %s0, %s195
      %s197 = smul.u32 32, %s15
      %s198 = smul.u32 32, %s15
      %p199 = scmp.lt.s32.totalorder %s198, 63
      %s200 = scalar_select %p199, %s198, 63
      %s201 = smul.addr %s200, 8
      %s202 = scalar_lea.vmem %s4, %s201
      %s203 = smul.u32 32, %s15
      %v204 = vld [vmem:[%s196] sm:$0xff]
      %v205 = vld [vmem:[%s196 + $0x8] sm:$0xff]
      %v206 = vld [vmem:[%s196 + $0x10] sm:$0xff]
      %v207 = vld [vmem:[%s196 + $0x18] sm:$0xff]
      %v208 = vld [vmem:[%s196 + $0x20] sm:$0xff]
      %v209 = vld [vmem:[%s196 + $0x28] sm:$0xff]
      %v210 = vld [vmem:[%s196 + $0x30] sm:$0xff]
      %v211 = vld [vmem:[%s196 + $0x38] sm:$0xff]
      %v212 = vld [vmem:[%s196 + $0x40] sm:$0xff]
      %v213 = vld [vmem:[%s196 + $0x48] sm:$0xff]
      %v214 = vld [vmem:[%s196 + $0x50] sm:$0xff]
      %v215 = vld [vmem:[%s196 + $0x58] sm:$0xff]
      %v216 = vld [vmem:[%s196 + $0x60] sm:$0xff]
      %v217 = vld [vmem:[%s196 + $0x68] sm:$0xff]
      %v218 = vld [vmem:[%s196 + $0x70] sm:$0xff]
      %v219 = vld [vmem:[%s196 + $0x78] sm:$0xff]
      %v220 = vld [vmem:[%s196 + $0x80] sm:$0xff]
      %v221 = vld [vmem:[%s196 + $0x88] sm:$0xff]
      %v222 = vld [vmem:[%s196 + $0x90] sm:$0xff]
      %v223 = vld [vmem:[%s196 + $0x98] sm:$0xff]
      %v224 = vld [vmem:[%s196 + $0xa0] sm:$0xff]
      %v225 = vld [vmem:[%s196 + $0xa8] sm:$0xff]
      %v226 = vld [vmem:[%s196 + $0xb0] sm:$0xff]
      %v227 = vld [vmem:[%s196 + $0xb8] sm:$0xff]
      %v228 = vld [vmem:[%s196 + $0xc0] sm:$0xff]
      %v229 = vld [vmem:[%s196 + $0xc8] sm:$0xff]
      %v230 = vld [vmem:[%s196 + $0xd0] sm:$0xff]
      %v231 = vld [vmem:[%s196 + $0xd8] sm:$0xff]
      %v232 = vld [vmem:[%s196 + $0xe0] sm:$0xff]
      %v233 = vld [vmem:[%s196 + $0xe8] sm:$0xff]
      %v234 = vld [vmem:[%s196 + $0xf0] sm:$0xff]
      %v235 = vld [vmem:[%s196 + $0xf8] sm:$0xff]
      %v236 = vld [vmem:[%s196 + $0x100] sm:$0xff]
      %v237 = vld [vmem:[%s196 + $0x108] sm:$0xff]
      %v238 = vld [vmem:[%s196 + $0x110] sm:$0xff]
      %v239 = vld [vmem:[%s196 + $0x118] sm:$0xff]
      %v240 = vld [vmem:[%s196 + $0x120] sm:$0xff]
      %v241 = vld [vmem:[%s196 + $0x128] sm:$0xff]
      %v242 = vld [vmem:[%s196 + $0x130] sm:$0xff]
      %v243 = vld [vmem:[%s196 + $0x138] sm:$0xff]
      %v244 = vld [vmem:[%s196 + $0x140] sm:$0xff]
      %v245 = vld [vmem:[%s196 + $0x148] sm:$0xff]
      %v246 = vld [vmem:[%s196 + $0x150] sm:$0xff]
      %v247 = vld [vmem:[%s196 + $0x158] sm:$0xff]
      %v248 = vld [vmem:[%s196 + $0x160] sm:$0xff]
      %v249 = vld [vmem:[%s196 + $0x168] sm:$0xff]
      %v250 = vld [vmem:[%s196 + $0x170] sm:$0xff]
      %v251 = vld [vmem:[%s196 + $0x178] sm:$0xff]
      %v252 = vld [vmem:[%s196 + $0x180] sm:$0xff]
      %v253 = vld [vmem:[%s196 + $0x188] sm:$0xff]
      %v254 = vld [vmem:[%s196 + $0x190] sm:$0xff]
      %v255 = vld [vmem:[%s196 + $0x198] sm:$0xff]
      %v256 = vld [vmem:[%s196 + $0x1a0] sm:$0xff]
      %v257 = vld [vmem:[%s196 + $0x1a8] sm:$0xff]
      %v258 = vld [vmem:[%s196 + $0x1b0] sm:$0xff]
      %v259 = vld [vmem:[%s196 + $0x1b8] sm:$0xff]
      %v260 = vld [vmem:[%s196 + $0x1c0] sm:$0xff]
      %v261 = vld [vmem:[%s196 + $0x1c8] sm:$0xff]
      %v262 = vld [vmem:[%s196 + $0x1d0] sm:$0xff]
      %v263 = vld [vmem:[%s196 + $0x1d8] sm:$0xff]
      %v264 = vld [vmem:[%s196 + $0x1e0] sm:$0xff]
      %v265 = vld [vmem:[%s196 + $0x1e8] sm:$0xff]
      %v266 = vld [vmem:[%s196 + $0x1f0] sm:$0xff]
      %v267 = vld [vmem:[%s196 + $0x1f8] sm:$0xff]
      %v268 = vld [vmem:[%s1] sm:$0xff]
      %v269 = vld [vmem:[%s1 + $0x8] sm:$0xff]
      %v270 = vld [vmem:[%s1 + $0x10] sm:$0xff]
      %v271 = vld [vmem:[%s1 + $0x18] sm:$0xff]
      %v272 = vld [vmem:[%s1 + $0x20] sm:$0xff]
      %v273 = vld [vmem:[%s1 + $0x28] sm:$0xff]
      %v274 = vld [vmem:[%s1 + $0x30] sm:$0xff]
      %v275 = vld [vmem:[%s1 + $0x38] sm:$0xff]
      %v276 = vld [vmem:[%s1 + $0x40] sm:$0xff]
      %v277 = vld [vmem:[%s1 + $0x48] sm:$0xff]
      %v278 = vld [vmem:[%s1 + $0x50] sm:$0xff]
      %v279 = vld [vmem:[%s1 + $0x58] sm:$0xff]
      %v280 = vld [vmem:[%s1 + $0x60] sm:$0xff]
      %v281 = vld [vmem:[%s1 + $0x68] sm:$0xff]
      %v282 = vld [vmem:[%s1 + $0x70] sm:$0xff]
      %v283 = vld [vmem:[%s1 + $0x78] sm:$0xff]
      %v284 = vld [vmem:[%s1 + $0x80] sm:$0xff]
      %v285 = vld [vmem:[%s1 + $0x88] sm:$0xff]
      %v286 = vld [vmem:[%s1 + $0x90] sm:$0xff]
      %v287 = vld [vmem:[%s1 + $0x98] sm:$0xff]
      %v288 = vld [vmem:[%s1 + $0xa0] sm:$0xff]
      %v289 = vld [vmem:[%s1 + $0xa8] sm:$0xff]
      %v290 = vld [vmem:[%s1 + $0xb0] sm:$0xff]
      %v291 = vld [vmem:[%s1 + $0xb8] sm:$0xff]
      %v292 = vld [vmem:[%s1 + $0xc0] sm:$0xff]
      %v293 = vld [vmem:[%s1 + $0xc8] sm:$0xff]
      %v294 = vld [vmem:[%s1 + $0xd0] sm:$0xff]
      %v295 = vld [vmem:[%s2] sm:$0x1]
      %v297 = vperm.slane %v295, 0
      %vm299 = vcmask 719872
      %v301 = vsel %vm299, %v205, 0
      %v304 = vsel %vm299, %v207, 0
      %v307 = vsel %vm299, %v209, 0
      %v310 = vsel %vm299, %v211, 0
      %v313 = vsel %vm299, %v213, 0
      %v316 = vsel %vm299, %v215, 0
      %v319 = vsel %vm299, %v217, 0
      %v322 = vsel %vm299, %v219, 0
      %v325 = vsel %vm299, %v221, 0
      %v328 = vsel %vm299, %v223, 0
      %v331 = vsel %vm299, %v225, 0
      %v334 = vsel %vm299, %v227, 0
      %v337 = vsel %vm299, %v229, 0
      %v340 = vsel %vm299, %v231, 0
      %v343 = vsel %vm299, %v233, 0
      %v346 = vsel %vm299, %v235, 0
      %v349 = vsel %vm299, %v237, 0
      %v352 = vsel %vm299, %v239, 0
      %v355 = vsel %vm299, %v241, 0
      %v358 = vsel %vm299, %v243, 0
      %v361 = vsel %vm299, %v245, 0
      %v364 = vsel %vm299, %v247, 0
      %v367 = vsel %vm299, %v249, 0
      %v370 = vsel %vm299, %v251, 0
      %v373 = vsel %vm299, %v253, 0
      %v376 = vsel %vm299, %v255, 0
      %v379 = vsel %vm299, %v257, 0
      %v382 = vsel %vm299, %v259, 0
      %v385 = vsel %vm299, %v261, 0
      %v388 = vsel %vm299, %v263, 0
      %v391 = vsel %vm299, %v265, 0
      %v394 = vsel %vm299, %v267, 0
      %396 = vmatpush.msra.mxu0 %v283
      %397 = vmatpush.msra.mxu0 %v282
      %398 = vmatpush.msra.mxu0 %v281
      %399 = vmatpush.msra.mxu0 %v280
      %400 = vmatpush.msra.mxu0 %v279
      %401 = vmatpush.msra.mxu0 %v278
      %402 = vmatpush.msra.mxu0 %v277
      %403 = vmatpush.msra.mxu0 %v276
      %404 = vmatpush.msra.mxu0 %v275
      %405 = vmatpush.msra.mxu0 %v274
      %406 = vmatpush.msra.mxu0 %v273
      %407 = vmatpush.msra.mxu0 %v272
      %408 = vmatpush.msra.mxu0 %v271
      %409 = vmatpush.msra.mxu0 %v270
      %410 = vmatpush.msra.mxu0 %v269
      %411 = vmatpush.msra.mxu0 %v268
      %412 = vmatmul.f32.gmra.mxu0 %v204
      %v413 = vpop.f32.mrf.mxu0
      %v414 = vadd.f32 %v297, %v413
      %415 = vmatmul.f32.gmra.mxu0 %v206
      %v416 = vpop.f32.mrf.mxu0
      %v417 = vadd.f32 %v297, %v416
      %418 = vmatmul.f32.gmra.mxu0 %v208
      %v419 = vpop.f32.mrf.mxu0
      %v420 = vadd.f32 %v297, %v419
      %421 = vmatmul.f32.gmra.mxu0 %v210
      %v422 = vpop.f32.mrf.mxu0
      %v423 = vadd.f32 %v297, %v422
      %424 = vmatmul.f32.gmra.mxu0 %v212
      %v425 = vpop.f32.mrf.mxu0
      %v426 = vadd.f32 %v297, %v425
      %427 = vmatmul.f32.gmra.mxu0 %v214
      %v428 = vpop.f32.mrf.mxu0
      %v429 = vadd.f32 %v297, %v428
      %430 = vmatmul.f32.gmra.mxu0 %v216
      %v431 = vpop.f32.mrf.mxu0
      %v432 = vadd.f32 %v297, %v431
      %433 = vmatmul.f32.gmra.mxu0 %v218
      %v434 = vpop.f32.mrf.mxu0
      %v435 = vadd.f32 %v297, %v434
      %436 = vmatmul.f32.gmra.mxu0 %v220
      %v437 = vpop.f32.mrf.mxu0
      %v438 = vadd.f32 %v297, %v437
      %439 = vmatmul.f32.gmra.mxu0 %v222
      %v440 = vpop.f32.mrf.mxu0
      %v441 = vadd.f32 %v297, %v440
      %442 = vmatmul.f32.gmra.mxu0 %v224
      %v443 = vpop.f32.mrf.mxu0
      %v444 = vadd.f32 %v297, %v443
      %445 = vmatmul.f32.gmra.mxu0 %v226
      %v446 = vpop.f32.mrf.mxu0
      %v447 = vadd.f32 %v297, %v446
      %448 = vmatmul.f32.gmra.mxu0 %v228
      %v449 = vpop.f32.mrf.mxu0
      %v450 = vadd.f32 %v297, %v449
      %451 = vmatmul.f32.gmra.mxu0 %v230
      %v452 = vpop.f32.mrf.mxu0
      %v453 = vadd.f32 %v297, %v452
      %454 = vmatmul.f32.gmra.mxu0 %v232
      %v455 = vpop.f32.mrf.mxu0
      %v456 = vadd.f32 %v297, %v455
      %457 = vmatmul.f32.gmra.mxu0 %v234
      %v458 = vpop.f32.mrf.mxu0
      %v459 = vadd.f32 %v297, %v458
      %460 = vmatmul.f32.gmra.mxu0 %v236
      %v461 = vpop.f32.mrf.mxu0
      %v462 = vadd.f32 %v297, %v461
      %463 = vmatmul.f32.gmra.mxu0 %v238
      %v464 = vpop.f32.mrf.mxu0
      %v465 = vadd.f32 %v297, %v464
      %466 = vmatmul.f32.gmra.mxu0 %v240
      %v467 = vpop.f32.mrf.mxu0
      %v468 = vadd.f32 %v297, %v467
      %469 = vmatmul.f32.gmra.mxu0 %v242
      %v470 = vpop.f32.mrf.mxu0
      %v471 = vadd.f32 %v297, %v470
      %472 = vmatmul.f32.gmra.mxu0 %v244
      %v473 = vpop.f32.mrf.mxu0
      %v474 = vadd.f32 %v297, %v473
      %475 = vmatmul.f32.gmra.mxu0 %v246
      %v476 = vpop.f32.mrf.mxu0
      %v477 = vadd.f32 %v297, %v476
      %478 = vmatmul.f32.gmra.mxu0 %v248
      %v479 = vpop.f32.mrf.mxu0
      %v480 = vadd.f32 %v297, %v479
      %481 = vmatmul.f32.gmra.mxu0 %v250
      %v482 = vpop.f32.mrf.mxu0
      %v483 = vadd.f32 %v297, %v482
      %484 = vmatmul.f32.gmra.mxu0 %v252
      %v485 = vpop.f32.mrf.mxu0
      %v486 = vadd.f32 %v297, %v485
      %487 = vmatmul.f32.gmra.mxu0 %v254
      %v488 = vpop.f32.mrf.mxu0
      %v489 = vadd.f32 %v297, %v488
      %490 = vmatmul.f32.gmra.mxu0 %v256
      %v491 = vpop.f32.mrf.mxu0
      %v492 = vadd.f32 %v297, %v491
      %493 = vmatmul.f32.gmra.mxu0 %v258
      %v494 = vpop.f32.mrf.mxu0
      %v495 = vadd.f32 %v297, %v494
      %496 = vmatmul.f32.gmra.mxu0 %v260
      %v497 = vpop.f32.mrf.mxu0
      %v498 = vadd.f32 %v297, %v497
      %499 = vmatmul.f32.gmra.mxu0 %v262
      %v500 = vpop.f32.mrf.mxu0
      %v501 = vadd.f32 %v297, %v500
      %502 = vmatmul.f32.gmra.mxu0 %v264
      %v503 = vpop.f32.mrf.mxu0
      %v504 = vadd.f32 %v297, %v503
      %505 = vmatmul.f32.gmra.mxu0 %v266
      %v506 = vpop.f32.mrf.mxu0
      %v507 = vadd.f32 %v297, %v506
      %508 = vdwg.mxu0
      %509 = vmatpush.msra.mxu0 0.0
      %510 = vmatpush.msra.mxu0 0.0
      %511 = vmatpush.msra.mxu0 0.0
      %512 = vmatpush.msra.mxu0 0.0
      %513 = vmatpush.msra.mxu0 0.0
      %514 = vmatpush.msra.mxu0 %v294
      %515 = vmatpush.msra.mxu0 %v293
      %516 = vmatpush.msra.mxu0 %v292
      %517 = vmatpush.msra.mxu0 %v291
      %518 = vmatpush.msra.mxu0 %v290
      %519 = vmatpush.msra.mxu0 %v289
      %520 = vmatpush.msra.mxu0 %v288
      %521 = vmatpush.msra.mxu0 %v287
      %522 = vmatpush.msra.mxu0 %v286
      %523 = vmatpush.msra.mxu0 %v285
      %524 = vmatpush.msra.mxu0 %v284
      %525 = vmatmul.f32.gmra.mxu0 %v301
      %v526 = vpop.f32.mrf.mxu0
      %v527 = vadd.f32 %v414, %v526
      %528 = vmatmul.f32.gmra.mxu0 %v304
      %v529 = vpop.f32.mrf.mxu0
      %v530 = vadd.f32 %v417, %v529
      %531 = vmatmul.f32.gmra.mxu0 %v307
      %v532 = vpop.f32.mrf.mxu0
      %v533 = vadd.f32 %v420, %v532
      %534 = vmatmul.f32.gmra.mxu0 %v310
      %v535 = vpop.f32.mrf.mxu0
      %v536 = vadd.f32 %v423, %v535
      %537 = vmatmul.f32.gmra.mxu0 %v313
      %v538 = vpop.f32.mrf.mxu0
      %v539 = vadd.f32 %v426, %v538
      %540 = vmatmul.f32.gmra.mxu0 %v316
      %v541 = vpop.f32.mrf.mxu0
      %v542 = vadd.f32 %v429, %v541
      %543 = vmatmul.f32.gmra.mxu0 %v319
      %v544 = vpop.f32.mrf.mxu0
      %v545 = vadd.f32 %v432, %v544
      %546 = vmatmul.f32.gmra.mxu0 %v322
      %v547 = vpop.f32.mrf.mxu0
      %v548 = vadd.f32 %v435, %v547
      %549 = vmatmul.f32.gmra.mxu0 %v325
      %v550 = vpop.f32.mrf.mxu0
      %v551 = vadd.f32 %v438, %v550
      %552 = vmatmul.f32.gmra.mxu0 %v328
      %v553 = vpop.f32.mrf.mxu0
      %v554 = vadd.f32 %v441, %v553
      %555 = vmatmul.f32.gmra.mxu0 %v331
      %v556 = vpop.f32.mrf.mxu0
      %v557 = vadd.f32 %v444, %v556
      %558 = vmatmul.f32.gmra.mxu0 %v334
      %v559 = vpop.f32.mrf.mxu0
      %v560 = vadd.f32 %v447, %v559
      %561 = vmatmul.f32.gmra.mxu0 %v337
      %v562 = vpop.f32.mrf.mxu0
      %v563 = vadd.f32 %v450, %v562
      %564 = vmatmul.f32.gmra.mxu0 %v340
      %v565 = vpop.f32.mrf.mxu0
      %v566 = vadd.f32 %v453, %v565
      %567 = vmatmul.f32.gmra.mxu0 %v343
      %v568 = vpop.f32.mrf.mxu0
      %v569 = vadd.f32 %v456, %v568
      %570 = vmatmul.f32.gmra.mxu0 %v346
      %v571 = vpop.f32.mrf.mxu0
      %v572 = vadd.f32 %v459, %v571
      %573 = vmatmul.f32.gmra.mxu0 %v349
      %v574 = vpop.f32.mrf.mxu0
      %v575 = vadd.f32 %v462, %v574
      %576 = vmatmul.f32.gmra.mxu0 %v352
      %v577 = vpop.f32.mrf.mxu0
      %v578 = vadd.f32 %v465, %v577
      %579 = vmatmul.f32.gmra.mxu0 %v355
      %v580 = vpop.f32.mrf.mxu0
      %v581 = vadd.f32 %v468, %v580
      %582 = vmatmul.f32.gmra.mxu0 %v358
      %v583 = vpop.f32.mrf.mxu0
      %v584 = vadd.f32 %v471, %v583
      %585 = vmatmul.f32.gmra.mxu0 %v361
      %v586 = vpop.f32.mrf.mxu0
      %v587 = vadd.f32 %v474, %v586
      %588 = vmatmul.f32.gmra.mxu0 %v364
      %v589 = vpop.f32.mrf.mxu0
      %v590 = vadd.f32 %v477, %v589
      %591 = vmatmul.f32.gmra.mxu0 %v367
      %v592 = vpop.f32.mrf.mxu0
      %v593 = vadd.f32 %v480, %v592
      %594 = vmatmul.f32.gmra.mxu0 %v370
      %v595 = vpop.f32.mrf.mxu0
      %v596 = vadd.f32 %v483, %v595
      %597 = vmatmul.f32.gmra.mxu0 %v373
      %v598 = vpop.f32.mrf.mxu0
      %v599 = vadd.f32 %v486, %v598
      %600 = vmatmul.f32.gmra.mxu0 %v376
      %v601 = vpop.f32.mrf.mxu0
      %v602 = vadd.f32 %v489, %v601
      %603 = vmatmul.f32.gmra.mxu0 %v379
      %v604 = vpop.f32.mrf.mxu0
      %v605 = vadd.f32 %v492, %v604
      %606 = vmatmul.f32.gmra.mxu0 %v382
      %v607 = vpop.f32.mrf.mxu0
      %v608 = vadd.f32 %v495, %v607
      %609 = vmatmul.f32.gmra.mxu0 %v385
      %v610 = vpop.f32.mrf.mxu0
      %v611 = vadd.f32 %v498, %v610
      %612 = vmatmul.f32.gmra.mxu0 %v388
      %v613 = vpop.f32.mrf.mxu0
      %v614 = vadd.f32 %v501, %v613
      %615 = vmatmul.f32.gmra.mxu0 %v391
      %v616 = vpop.f32.mrf.mxu0
      %v617 = vadd.f32 %v504, %v616
      %618 = vmatmul.f32.gmra.mxu0 %v394
      %v619 = vpop.f32.mrf.mxu0
      %v620 = vadd.f32 %v507, %v619
      %621 = vdwg.mxu0
      %vm622 = vcmp.ge.f32.partialorder %v527, 0.0
      %vm623 = vcmp.ge.f32.partialorder %v530, 0.0
      %vm624 = vcmp.ge.f32.partialorder %v533, 0.0
      %vm625 = vcmp.ge.f32.partialorder %v536, 0.0
      %vm626 = vcmp.ge.f32.partialorder %v539, 0.0
      %vm627 = vcmp.ge.f32.partialorder %v542, 0.0
      %vm628 = vcmp.ge.f32.partialorder %v545, 0.0
      %vm629 = vcmp.ge.f32.partialorder %v548, 0.0
      %vm630 = vcmp.ge.f32.partialorder %v551, 0.0
      %vm631 = vcmp.ge.f32.partialorder %v554, 0.0
      %vm632 = vcmp.ge.f32.partialorder %v557, 0.0
      %vm633 = vcmp.ge.f32.partialorder %v560, 0.0
      %vm634 = vcmp.ge.f32.partialorder %v563, 0.0
      %vm635 = vcmp.ge.f32.partialorder %v566, 0.0
      %vm636 = vcmp.ge.f32.partialorder %v569, 0.0
      %vm637 = vcmp.ge.f32.partialorder %v572, 0.0
      %vm638 = vcmp.ge.f32.partialorder %v575, 0.0
      %vm639 = vcmp.ge.f32.partialorder %v578, 0.0
      %vm640 = vcmp.ge.f32.partialorder %v581, 0.0
      %vm641 = vcmp.ge.f32.partialorder %v584, 0.0
      %vm642 = vcmp.ge.f32.partialorder %v587, 0.0
      %vm643 = vcmp.ge.f32.partialorder %v590, 0.0
      %vm644 = vcmp.ge.f32.partialorder %v593, 0.0
      %vm645 = vcmp.ge.f32.partialorder %v596, 0.0
      %vm646 = vcmp.ge.f32.partialorder %v599, 0.0
      %vm647 = vcmp.ge.f32.partialorder %v602, 0.0
      %vm648 = vcmp.ge.f32.partialorder %v605, 0.0
      %vm649 = vcmp.ge.f32.partialorder %v608, 0.0
      %vm650 = vcmp.ge.f32.partialorder %v611, 0.0
      %vm651 = vcmp.ge.f32.partialorder %v614, 0.0
      %vm652 = vcmp.ge.f32.partialorder %v617, 0.0
      %vm653 = vcmp.ge.f32.partialorder %v620, 0.0
      %v654 = vld [vmem:[%s3] sm:$0x1]
      %v656 = vperm.slane %v654, 0
      %v658 = vmul.f32 %v527, %v656
      %v659 = vmul.f32 %v530, %v656
      %v660 = vmul.f32 %v533, %v656
      %v661 = vmul.f32 %v536, %v656
      %v662 = vmul.f32 %v539, %v656
      %v663 = vmul.f32 %v542, %v656
      %v664 = vmul.f32 %v545, %v656
      %v665 = vmul.f32 %v548, %v656
      %v666 = vmul.f32 %v551, %v656
      %v667 = vmul.f32 %v554, %v656
      %v668 = vmul.f32 %v557, %v656
      %v669 = vmul.f32 %v560, %v656
      %v670 = vmul.f32 %v563, %v656
      %v671 = vmul.f32 %v566, %v656
      %v672 = vmul.f32 %v569, %v656
      %v673 = vmul.f32 %v572, %v656
      %v674 = vmul.f32 %v575, %v656
      %v675 = vmul.f32 %v578, %v656
      %v676 = vmul.f32 %v581, %v656
      %v677 = vmul.f32 %v584, %v656
      %v678 = vmul.f32 %v587, %v656
      %v679 = vmul.f32 %v590, %v656
      %v680 = vmul.f32 %v593, %v656
      %v681 = vmul.f32 %v596, %v656
      %v682 = vmul.f32 %v599, %v656
      %v683 = vmul.f32 %v602, %v656
      %v684 = vmul.f32 %v605, %v656
      %v685 = vmul.f32 %v608, %v656
      %v686 = vmul.f32 %v611, %v656
      %v687 = vmul.f32 %v614, %v656
      %v688 = vmul.f32 %v617, %v656
      %v689 = vmul.f32 %v620, %v656
      %v690 = vsel %vm622, %v527, %v658
      %v691 = vsel %vm623, %v530, %v659
      %v692 = vsel %vm624, %v533, %v660
      %v693 = vsel %vm625, %v536, %v661
      %v694 = vsel %vm626, %v539, %v662
      %v695 = vsel %vm627, %v542, %v663
      %v696 = vsel %vm628, %v545, %v664
      %v697 = vsel %vm629, %v548, %v665
      %v698 = vsel %vm630, %v551, %v666
      %v699 = vsel %vm631, %v554, %v667
      %v700 = vsel %vm632, %v557, %v668
      %v701 = vsel %vm633, %v560, %v669
      %v702 = vsel %vm634, %v563, %v670
      %v703 = vsel %vm635, %v566, %v671
      %v704 = vsel %vm636, %v569, %v672
      %v705 = vsel %vm637, %v572, %v673
      %v706 = vsel %vm638, %v575, %v674
      %v707 = vsel %vm639, %v578, %v675
      %v708 = vsel %vm640, %v581, %v676
      %v709 = vsel %vm641, %v584, %v677
      %v710 = vsel %vm642, %v587, %v678
      %v711 = vsel %vm643, %v590, %v679
      %v712 = vsel %vm644, %v593, %v680
      %v713 = vsel %vm645, %v596, %v681
      %v714 = vsel %vm646, %v599, %v682
      %v715 = vsel %vm647, %v602, %v683
      %v716 = vsel %vm648, %v605, %v684
      %v717 = vsel %vm649, %v608, %v685
      %v718 = vsel %vm650, %v611, %v686
      %v719 = vsel %vm651, %v614, %v687
      %v720 = vsel %vm652, %v617, %v688
      %v721 = vsel %vm653, %v620, %v689
      %vm722 = vcmask 64512
      %723 = vst.msk [vmem:[%s202] sm:$0xff] %vm722, %v690
      %724 = vst.msk [vmem:[%s202 + $0x8] sm:$0xff] %vm722, %v691
      %725 = vst.msk [vmem:[%s202 + $0x10] sm:$0xff] %vm722, %v692
      %726 = vst.msk [vmem:[%s202 + $0x18] sm:$0xff] %vm722, %v693
      %727 = vst.msk [vmem:[%s202 + $0x20] sm:$0xff] %vm722, %v694
      %728 = vst.msk [vmem:[%s202 + $0x28] sm:$0xff] %vm722, %v695
      %729 = vst.msk [vmem:[%s202 + $0x30] sm:$0xff] %vm722, %v696
      %730 = vst.msk [vmem:[%s202 + $0x38] sm:$0xff] %vm722, %v697
      %731 = vst.msk [vmem:[%s202 + $0x40] sm:$0xff] %vm722, %v698
      %732 = vst.msk [vmem:[%s202 + $0x48] sm:$0xff] %vm722, %v699
      %733 = vst.msk [vmem:[%s202 + $0x50] sm:$0xff] %vm722, %v700
      %734 = vst.msk [vmem:[%s202 + $0x58] sm:$0xff] %vm722, %v701
      %735 = vst.msk [vmem:[%s202 + $0x60] sm:$0xff] %vm722, %v702
      %736 = vst.msk [vmem:[%s202 + $0x68] sm:$0xff] %vm722, %v703
      %737 = vst.msk [vmem:[%s202 + $0x70] sm:$0xff] %vm722, %v704
      %738 = vst.msk [vmem:[%s202 + $0x78] sm:$0xff] %vm722, %v705
      %739 = vst.msk [vmem:[%s202 + $0x80] sm:$0xff] %vm722, %v706
      %740 = vst.msk [vmem:[%s202 + $0x88] sm:$0xff] %vm722, %v707
      %741 = vst.msk [vmem:[%s202 + $0x90] sm:$0xff] %vm722, %v708
      %742 = vst.msk [vmem:[%s202 + $0x98] sm:$0xff] %vm722, %v709
      %743 = vst.msk [vmem:[%s202 + $0xa0] sm:$0xff] %vm722, %v710
      %744 = vst.msk [vmem:[%s202 + $0xa8] sm:$0xff] %vm722, %v711
      %745 = vst.msk [vmem:[%s202 + $0xb0] sm:$0xff] %vm722, %v712
      %746 = vst.msk [vmem:[%s202 + $0xb8] sm:$0xff] %vm722, %v713
      %747 = vst.msk [vmem:[%s202 + $0xc0] sm:$0xff] %vm722, %v714
      %748 = vst.msk [vmem:[%s202 + $0xc8] sm:$0xff] %vm722, %v715
      %749 = vst.msk [vmem:[%s202 + $0xd0] sm:$0xff] %vm722, %v716
      %750 = vst.msk [vmem:[%s202 + $0xd8] sm:$0xff] %vm722, %v717
      %751 = vst.msk [vmem:[%s202 + $0xe0] sm:$0xff] %vm722, %v718
      %752 = vst.msk [vmem:[%s202 + $0xe8] sm:$0xff] %vm722, %v719
      %753 = vst.msk [vmem:[%s202 + $0xf0] sm:$0xff] %vm722, %v720
      %754 = vst.msk [vmem:[%s202 + $0xf8] sm:$0xff] %vm722, %v721
      %s755 = smul.u32 32, %s15
      %p756 = scmp.lt.s32.totalorder %s755, 63
      %s757 = scalar_select %p756, %s755, 63
      %s758 = smul.addr %s757, 8
      %s759 = scalar_lea.vmem %s4, %s758
      // Predicated region
      $region37: #{meta_ms_forward.3} parent=35 // pred_check
        %p760 = pneg %p122
      $region38: #{meta_ms_forward.3} parent=35 // pred_check_branch
        %762 = sbr.rel (%p760) target = $region40
      $region39: #{meta_ms_forward.3} parent=35 // pred_region
        %s763 = smul.u32 32, %s15
      $region40: #{meta_ms_forward.3} parent=35 // pred_fallthru
        _
    $region36: #{meta_ms_forward.3} parent=5 // pred_fallthru
      _
    %p764 = scmp.le.s32.totalorder 2, %s10
    // Predicated region
    $region41: #{meta_ms_forward.3} parent=5 // pred_check
      %p765 = pneg %p764
    $region42: #{meta_ms_forward.3} parent=5 // pred_check_branch
      %767 = sbr.rel (%p765) target = $region44
    $region43: #{meta_ms_forward.3} parent=5 // pred_region
      %s768 = ssub.s32 %s10, 2
      // Predicated region
      $region45: #{meta_ms_forward.3} parent=43 // pred_check
        %p769 = pneg %p128
      $region46: #{meta_ms_forward.3} parent=43 // pred_check_branch
        %771 = sbr.rel (%p769) target = $region48
      $region47: #{meta_ms_forward.3} parent=43 // pred_region
        %s772 = smul.u32 32, %s16
        %p773 = scmp.lt.s32.totalorder %s772, 63
        %s774 = scalar_select %p773, %s772, 63
        %s775 = smul.addr %s774, 8
        %s776 = scalar_lea.vmem %s4, %s775
      $region48: #{meta_ms_forward.3} parent=43 // pred_fallthru
        _
    $region44: #{meta_ms_forward.3} parent=5 // pred_fallthru
      _
  $region6: #{meta_ms_forward.3} parent=0 // loop_footer
    %s14 = sadd.s32 1, %s10
  $region7: #{meta_ms_forward.3} parent=0 // loop_footer_branch
    %9 = sbr.rel target = $region3
  $region8: #{meta_ms_forward.3} parent=0 // loop_exit
    _

// kernel: meta_ms_forward.4
$region0: #{meta_ms_forward.4}
  #allocation0 [shape = 'u32[]', space=smem, size = 0x4, offset = 0x4, fixed_abs, tag = 'smem constant byte address 0x4 - core index']
  #allocation1 [shape = 'u32[72,128]{1,0:T(1,128)}', space=vmem, size = 0x9000, scoped, tag = 'internal scratch']
  %s0 = inlined_call_operand.vmem [shape: f32[512,216], index: 0, kind: input, shape index: {}]
  %s1 = inlined_call_operand.vmem [shape: f32[216,8], index: 1, kind: input, shape index: {}]
  %s2 = inlined_call_operand.vmem [shape: f32[1,8], index: 2, kind: input, shape index: {}]
  %s3 = inlined_call_operand.vmem [shape: f32[512,8], index: 3, kind: output, shape index: {}]
  %s4 = sld [smem:[#allocation0]]
  $region45: #{meta_ms_forward.4} parent=0
    _
  %s6 = ssub.s32 1, %s4
  %s7 = scalar_select 0, %s6, %s4
  loop: start=0, step=1, limit=4
  $region2: #{meta_ms_forward.4} parent=0 // loop_pre_header
    _
  $region3: #{meta_ms_forward.4} parent=0 // loop_header
    %s9 = sphi 0, %s13
    %p10 = scmp.ge.s32.totalorder %s9, 4
    %s19 = sphi 0, %s21
    %s22 = sphi 0, %s19
    %s23 = sphi 0, %s22
    %s39 = sphi 0, %s23
    %s43 = sphi 0, %s43
    %s45 = sphi 0, %s43
    %s46 = sphi 0, %s45
    %s60 = sphi 0, %s46
    %s64 = sphi 0, %s64
    %s66 = sphi 0, %s64
    %s67 = sphi 0, %s66
    %s81 = sphi 0, %s67
    %s87 = sphi 0, %s89
    %s90 = sphi 0, %s87
    %s91 = sphi 0, %s90
    %s107 = sphi 0, %s91
  $region4: #{meta_ms_forward.4} parent=0 // loop_header_branch
    %12 = sbr.rel (%p10) target = $region8
  $region5: #{meta_ms_forward.4} parent=0 // loop_body
    %s14 = ssub.s32 %s9, 1
    %s15 = ssub.s32 %s9, 2
    %s16 = sadd.s32 %s9, 1
    %s17 = ssub.s32 %s9, %s16
    %p18 = scmp.eq.s32.totalorder %s17, 0
    %s20 = sadd.s32 %s19, 1
    %s21 = scalar_select %p18, %s19, %s20
    %p24 = pneg %p18
    %p25 = scmp.eq.s32.totalorder %s9, 1
    %p26 = por %p24, %p25
    %p27 = scmp.ne.s32.totalorder %s19, %s22
    %p28 = scmp.eq.s32.totalorder %s9, 0
    %p29 = por %p27, %p28
    %p30 = scmp.ne.s32.totalorder %s19, %s22
    %p31 = scmp.eq.s32.totalorder %s14, 1
    %p32 = por %p30, %p31
    %p33 = scmp.ne.s32.totalorder %s22, %s23
    %p34 = scmp.eq.s32.totalorder %s14, 0
    %p35 = por %p33, %p34
    %p36 = scmp.ne.s32.totalorder %s22, %s23
    %p37 = scmp.eq.s32.totalorder %s15, 1
    %p38 = por %p36, %p37
    %p40 = scmp.ne.s32.totalorder %s23, %s39
    %p41 = scmp.eq.s32.totalorder %s15, 0
    %p42 = por %p40, %p41
    %s44 = sadd.s32 %s43, 1
    %p47 = scmp.eq.s32.totalorder %s9, 1
    %p48 = scmp.ne.s32.totalorder %s43, %s45
    %p49 = scmp.eq.s32.totalorder %s9, 0
    %p50 = por %p48, %p49
    %p51 = scmp.ne.s32.totalorder %s43, %s45
    %p52 = scmp.eq.s32.totalorder %s14, 1
    %p53 = por %p51, %p52
    %p54 = scmp.ne.s32.totalorder %s45, %s46
    %p55 = scmp.eq.s32.totalorder %s14, 0
    %p56 = por %p54, %p55
    %p57 = scmp.ne.s32.totalorder %s45, %s46
    %p58 = scmp.eq.s32.totalorder %s15, 1
    %p59 = por %p57, %p58
    %p61 = scmp.ne.s32.totalorder %s46, %s60
    %p62 = scmp.eq.s32.totalorder %s15, 0
    %p63 = por %p61, %p62
    %s65 = sadd.s32 %s64, 1
    %p68 = scmp.eq.s32.totalorder %s9, 1
    %p69 = scmp.ne.s32.totalorder %s64, %s66
    %p70 = scmp.eq.s32.totalorder %s9, 0
    %p71 = por %p69, %p70
    %p72 = scmp.ne.s32.totalorder %s64, %s66
    %p73 = scmp.eq.s32.totalorder %s14, 1
    %p74 = por %p72, %p73
    %p75 = scmp.ne.s32.totalorder %s66, %s67
    %p76 = scmp.eq.s32.totalorder %s14, 0
    %p77 = por %p75, %p76
    %p78 = scmp.ne.s32.totalorder %s66, %s67
    %p79 = scmp.eq.s32.totalorder %s15, 1
    %p80 = por %p78, %p79
    %p82 = scmp.ne.s32.totalorder %s67, %s81
    %p83 = scmp.eq.s32.totalorder %s15, 0
    %p84 = por %p82, %p83
    %s85 = ssub.s32 %s9, %s16
    %p86 = scmp.eq.s32.totalorder %s85, 0
    %s88 = sadd.s32 %s87, 1
    %s89 = scalar_select %p86, %s87, %s88
    %p92 = pneg %p86
    %p93 = scmp.eq.s32.totalorder %s9, 1
    %p94 = por %p92, %p93
    %p95 = scmp.ne.s32.totalorder %s87, %s90
    %p96 = scmp.eq.s32.totalorder %s9, 0
    %p97 = por %p95, %p96
    %p98 = scmp.ne.s32.totalorder %s87, %s90
    %p99 = scmp.eq.s32.totalorder %s14, 1
    %p100 = por %p98, %p99
    %p101 = scmp.ne.s32.totalorder %s90, %s91
    %p102 = scmp.eq.s32.totalorder %s14, 0
    %p103 = por %p101, %p102
    %p104 = scmp.ne.s32.totalorder %s90, %s91
    %p105 = scmp.eq.s32.totalorder %s15, 1
    %p106 = por %p104, %p105
    %p108 = scmp.ne.s32.totalorder %s91, %s107
    %p109 = scmp.eq.s32.totalorder %s15, 0
    %p110 = por %p108, %p109
    %p111 = scmp.le.s32.totalorder 1, %s9
    %p112 = scmp.lt.s32.totalorder %s9, 3
    %p113 = pnand %p111, %p112
    %p114 = pneg %p113
    // Predicated region
    $region9: #{meta_ms_forward.4} parent=5 // pred_check
      _
    $region10: #{meta_ms_forward.4} parent=5 // pred_check_branch
      %116 = sbr.rel (%p113) target = $region12
    $region11: #{meta_ms_forward.4} parent=5 // pred_region
      %s117 = ssub.s32 %s9, 1
      // Predicated region
      $region13: #{meta_ms_forward.4} parent=11 // pred_check
        %p118 = pneg %p56
      $region14: #{meta_ms_forward.4} parent=11 // pred_check_branch
        %120 = sbr.rel (%p118) target = $region16
      $region15: #{meta_ms_forward.4} parent=11 // pred_region
        _
      $region16: #{meta_ms_forward.4} parent=11 // pred_fallthru
        _
      // Predicated region
      $region17: #{meta_ms_forward.4} parent=11 // pred_check
        %p121 = pneg %p77
      $region18: #{meta_ms_forward.4} parent=11 // pred_check_branch
        %123 = sbr.rel (%p121) target = $region20
      $region19: #{meta_ms_forward.4} parent=11 // pred_region
        _
      $region20: #{meta_ms_forward.4} parent=11 // pred_fallthru
        _
    $region12: #{meta_ms_forward.4} parent=5 // pred_fallthru
      _
    %p124 = scmp.lt.s32.totalorder %s9, 2
    // Predicated region
    $region21: #{meta_ms_forward.4} parent=5 // pred_check
      %p125 = pneg %p124
    $region22: #{meta_ms_forward.4} parent=5 // pred_check_branch
      %127 = sbr.rel (%p125) target = $region24
    $region23: #{meta_ms_forward.4} parent=5 // pred_region
      // Predicated region
      $region25: #{meta_ms_forward.4} parent=23 // pred_check
        %p128 = pneg %p29
      $region26: #{meta_ms_forward.4} parent=23 // pred_check_branch
        %130 = sbr.rel (%p128) target = $region28
      $region27: #{meta_ms_forward.4} parent=23 // pred_region
        %s131 = smul.u32 32, %s9
        %p132 = scmp.lt.s32.totalorder %s131, 63
        %s133 = scalar_select %p132, %s131, 63
        %s134 = smul.addr %s133, 2
        %s135 = smul.addr %s134, 8
        %s136 = scalar_lea.vmem %s0, %s135
        %s137 = smul.u32 32, %s9
      $region28: #{meta_ms_forward.4} parent=23 // pred_fallthru
        _
    $region24: #{meta_ms_forward.4} parent=5 // pred_fallthru
      _
    %p138 = scmp.le.s32.totalorder 1, %s9
    %p139 = scmp.lt.s32.totalorder %s9, 3
    %p140 = pnand %p138, %p139
    %p141 = pneg %p140
    // Predicated region
    $region29: #{meta_ms_forward.4} parent=5 // pred_check
      _
    $region30: #{meta_ms_forward.4} parent=5 // pred_check_branch
      %143 = sbr.rel (%p140) target = $region32
    $region31: #{meta_ms_forward.4} parent=5 // pred_region
      %s144 = ssub.s32 %s9, 1
      %s145 = smul.u32 32, %s14
      %p146 = scmp.lt.s32.totalorder %s145, 63
      %s147 = scalar_select %p146, %s145, 63
      %s148 = smul.addr %s147, 2
      %s149 = smul.addr %s148, 8
      %s150 = scalar_lea.vmem %s0, %s149
      %p151 = pneg %p35
      %p152 = pneg %p32
      %p153 = pneg %p56
      %p154 = pneg %p53
      %p155 = pneg %p77
      %p156 = pneg %p74
      %p157 = pneg %p103
      %p158 = pneg %p100
      %s159 = smul.u32 32, %s14
      %p160 = scmp.lt.s32.totalorder %s159, 63
      %s161 = scalar_select %p160, %s159, 63
      %s162 = smul.addr %s161, 8
      %s163 = scalar_lea.vmem %s3, %s162
      %s164 = smul.u32 32, %s14
      %p165 = scmp.lt.s32.totalorder %s164, 63
      %s166 = scalar_select %p165, %s164, 63
      %s167 = smul.addr %s166, 2
      %s168 = smul.addr %s167, 8
      %s169 = scalar_lea.vmem %s0, %s168
      %s170 = smul.u32 32, %s14
      %s171 = smul.u32 32, %s14
      %p172 = scmp.lt.s32.totalorder %s171, 63
      %s173 = scalar_select %p172, %s171, 63
      %s174 = smul.addr %s173, 8
      %s175 = scalar_lea.vmem %s3, %s174
      %s176 = smul.u32 32, %s14
      %v177 = vld [vmem:[%s169] sm:$0xff]
      %v178 = vld [vmem:[%s169 + $0x8] sm:$0xff]
      %v179 = vld [vmem:[%s169 + $0x10] sm:$0xff]
      %v180 = vld [vmem:[%s169 + $0x18] sm:$0xff]
      %v181 = vld [vmem:[%s169 + $0x20] sm:$0xff]
      %v182 = vld [vmem:[%s169 + $0x28] sm:$0xff]
      %v183 = vld [vmem:[%s169 + $0x30] sm:$0xff]
      %v184 = vld [vmem:[%s169 + $0x38] sm:$0xff]
      %v185 = vld [vmem:[%s169 + $0x40] sm:$0xff]
      %v186 = vld [vmem:[%s169 + $0x48] sm:$0xff]
      %v187 = vld [vmem:[%s169 + $0x50] sm:$0xff]
      %v188 = vld [vmem:[%s169 + $0x58] sm:$0xff]
      %v189 = vld [vmem:[%s169 + $0x60] sm:$0xff]
      %v190 = vld [vmem:[%s169 + $0x68] sm:$0xff]
      %v191 = vld [vmem:[%s169 + $0x70] sm:$0xff]
      %v192 = vld [vmem:[%s169 + $0x78] sm:$0xff]
      %v193 = vld [vmem:[%s169 + $0x80] sm:$0xff]
      %v194 = vld [vmem:[%s169 + $0x88] sm:$0xff]
      %v195 = vld [vmem:[%s169 + $0x90] sm:$0xff]
      %v196 = vld [vmem:[%s169 + $0x98] sm:$0xff]
      %v197 = vld [vmem:[%s169 + $0xa0] sm:$0xff]
      %v198 = vld [vmem:[%s169 + $0xa8] sm:$0xff]
      %v199 = vld [vmem:[%s169 + $0xb0] sm:$0xff]
      %v200 = vld [vmem:[%s169 + $0xb8] sm:$0xff]
      %v201 = vld [vmem:[%s169 + $0xc0] sm:$0xff]
      %v202 = vld [vmem:[%s169 + $0xc8] sm:$0xff]
      %v203 = vld [vmem:[%s169 + $0xd0] sm:$0xff]
      %v204 = vld [vmem:[%s169 + $0xd8] sm:$0xff]
      %v205 = vld [vmem:[%s169 + $0xe0] sm:$0xff]
      %v206 = vld [vmem:[%s169 + $0xe8] sm:$0xff]
      %v207 = vld [vmem:[%s169 + $0xf0] sm:$0xff]
      %v208 = vld [vmem:[%s169 + $0xf8] sm:$0xff]
      %v209 = vld [vmem:[%s169 + $0x100] sm:$0xff]
      %v210 = vld [vmem:[%s169 + $0x108] sm:$0xff]
      %v211 = vld [vmem:[%s169 + $0x110] sm:$0xff]
      %v212 = vld [vmem:[%s169 + $0x118] sm:$0xff]
      %v213 = vld [vmem:[%s169 + $0x120] sm:$0xff]
      %v214 = vld [vmem:[%s169 + $0x128] sm:$0xff]
      %v215 = vld [vmem:[%s169 + $0x130] sm:$0xff]
      %v216 = vld [vmem:[%s169 + $0x138] sm:$0xff]
      %v217 = vld [vmem:[%s169 + $0x140] sm:$0xff]
      %v218 = vld [vmem:[%s169 + $0x148] sm:$0xff]
      %v219 = vld [vmem:[%s169 + $0x150] sm:$0xff]
      %v220 = vld [vmem:[%s169 + $0x158] sm:$0xff]
      %v221 = vld [vmem:[%s169 + $0x160] sm:$0xff]
      %v222 = vld [vmem:[%s169 + $0x168] sm:$0xff]
      %v223 = vld [vmem:[%s169 + $0x170] sm:$0xff]
      %v224 = vld [vmem:[%s169 + $0x178] sm:$0xff]
      %v225 = vld [vmem:[%s169 + $0x180] sm:$0xff]
      %v226 = vld [vmem:[%s169 + $0x188] sm:$0xff]
      %v227 = vld [vmem:[%s169 + $0x190] sm:$0xff]
      %v228 = vld [vmem:[%s169 + $0x198] sm:$0xff]
      %v229 = vld [vmem:[%s169 + $0x1a0] sm:$0xff]
      %v230 = vld [vmem:[%s169 + $0x1a8] sm:$0xff]
      %v231 = vld [vmem:[%s169 + $0x1b0] sm:$0xff]
      %v232 = vld [vmem:[%s169 + $0x1b8] sm:$0xff]
      %v233 = vld [vmem:[%s169 + $0x1c0] sm:$0xff]
      %v234 = vld [vmem:[%s169 + $0x1c8] sm:$0xff]
      %v235 = vld [vmem:[%s169 + $0x1d0] sm:$0xff]
      %v236 = vld [vmem:[%s169 + $0x1d8] sm:$0xff]
      %v237 = vld [vmem:[%s169 + $0x1e0] sm:$0xff]
      %v238 = vld [vmem:[%s169 + $0x1e8] sm:$0xff]
      %v239 = vld [vmem:[%s169 + $0x1f0] sm:$0xff]
      %v240 = vld [vmem:[%s169 + $0x1f8] sm:$0xff]
      %v241 = vld [vmem:[%s1] sm:$0xff]
      %v242 = vld [vmem:[%s1 + $0x8] sm:$0xff]
      %v243 = vld [vmem:[%s1 + $0x10] sm:$0xff]
      %v244 = vld [vmem:[%s1 + $0x18] sm:$0xff]
      %v245 = vld [vmem:[%s1 + $0x20] sm:$0xff]
      %v246 = vld [vmem:[%s1 + $0x28] sm:$0xff]
      %v247 = vld [vmem:[%s1 + $0x30] sm:$0xff]
      %v248 = vld [vmem:[%s1 + $0x38] sm:$0xff]
      %v249 = vld [vmem:[%s1 + $0x40] sm:$0xff]
      %v250 = vld [vmem:[%s1 + $0x48] sm:$0xff]
      %v251 = vld [vmem:[%s1 + $0x50] sm:$0xff]
      %v252 = vld [vmem:[%s1 + $0x58] sm:$0xff]
      %v253 = vld [vmem:[%s1 + $0x60] sm:$0xff]
      %v254 = vld [vmem:[%s1 + $0x68] sm:$0xff]
      %v255 = vld [vmem:[%s1 + $0x70] sm:$0xff]
      %v256 = vld [vmem:[%s1 + $0x78] sm:$0xff]
      %v257 = vld [vmem:[%s1 + $0x80] sm:$0xff]
      %v258 = vld [vmem:[%s1 + $0x88] sm:$0xff]
      %v259 = vld [vmem:[%s1 + $0x90] sm:$0xff]
      %v260 = vld [vmem:[%s1 + $0x98] sm:$0xff]
      %v261 = vld [vmem:[%s1 + $0xa0] sm:$0xff]
      %v262 = vld [vmem:[%s1 + $0xa8] sm:$0xff]
      %v263 = vld [vmem:[%s1 + $0xb0] sm:$0xff]
      %v264 = vld [vmem:[%s1 + $0xb8] sm:$0xff]
      %v265 = vld [vmem:[%s1 + $0xc0] sm:$0xff]
      %v266 = vld [vmem:[%s1 + $0xc8] sm:$0xff]
      %v267 = vld [vmem:[%s1 + $0xd0] sm:$0xff]
      %v268 = vld [vmem:[%s2] sm:$0x1]
      %v270 = vperm.slane %v268, 0
      %vm272 = vcmask 719872
      %v274 = vsel %vm272, %v178, 0
      %v277 = vsel %vm272, %v180, 0
      %v280 = vsel %vm272, %v182, 0
      %v283 = vsel %vm272, %v184, 0
      %v286 = vsel %vm272, %v186, 0
      %v289 = vsel %vm272, %v188, 0
      %v292 = vsel %vm272, %v190, 0
      %v295 = vsel %vm272, %v192, 0
      %v298 = vsel %vm272, %v194, 0
      %v301 = vsel %vm272, %v196, 0
      %v304 = vsel %vm272, %v198, 0
      %v307 = vsel %vm272, %v200, 0
      %v310 = vsel %vm272, %v202, 0
      %v313 = vsel %vm272, %v204, 0
      %v316 = vsel %vm272, %v206, 0
      %v319 = vsel %vm272, %v208, 0
      %v322 = vsel %vm272, %v210, 0
      %v325 = vsel %vm272, %v212, 0
      %v328 = vsel %vm272, %v214, 0
      %v331 = vsel %vm272, %v216, 0
      %v334 = vsel %vm272, %v218, 0
      %v337 = vsel %vm272, %v220, 0
      %v340 = vsel %vm272, %v222, 0
      %v343 = vsel %vm272, %v224, 0
      %v346 = vsel %vm272, %v226, 0
      %v349 = vsel %vm272, %v228, 0
      %v352 = vsel %vm272, %v230, 0
      %v355 = vsel %vm272, %v232, 0
      %v358 = vsel %vm272, %v234, 0
      %v361 = vsel %vm272, %v236, 0
      %v364 = vsel %vm272, %v238, 0
      %v367 = vsel %vm272, %v240, 0
      %369 = vmatpush.msra.mxu0 %v256
      %370 = vmatpush.msra.mxu0 %v255
      %371 = vmatpush.msra.mxu0 %v254
      %372 = vmatpush.msra.mxu0 %v253
      %373 = vmatpush.msra.mxu0 %v252
      %374 = vmatpush.msra.mxu0 %v251
      %375 = vmatpush.msra.mxu0 %v250
      %376 = vmatpush.msra.mxu0 %v249
      %377 = vmatpush.msra.mxu0 %v248
      %378 = vmatpush.msra.mxu0 %v247
      %379 = vmatpush.msra.mxu0 %v246
      %380 = vmatpush.msra.mxu0 %v245
      %381 = vmatpush.msra.mxu0 %v244
      %382 = vmatpush.msra.mxu0 %v243
      %383 = vmatpush.msra.mxu0 %v242
      %384 = vmatpush.msra.mxu0 %v241
      %385 = vmatmul.f32.gmra.mxu0 %v177
      %v386 = vpop.f32.mrf.mxu0
      %v387 = vadd.f32 %v270, %v386
      %388 = vmatmul.f32.gmra.mxu0 %v179
      %v389 = vpop.f32.mrf.mxu0
      %v390 = vadd.f32 %v270, %v389
      %391 = vmatmul.f32.gmra.mxu0 %v181
      %v392 = vpop.f32.mrf.mxu0
      %v393 = vadd.f32 %v270, %v392
      %394 = vmatmul.f32.gmra.mxu0 %v183
      %v395 = vpop.f32.mrf.mxu0
      %v396 = vadd.f32 %v270, %v395
      %397 = vmatmul.f32.gmra.mxu0 %v185
      %v398 = vpop.f32.mrf.mxu0
      %v399 = vadd.f32 %v270, %v398
      %400 = vmatmul.f32.gmra.mxu0 %v187
      %v401 = vpop.f32.mrf.mxu0
      %v402 = vadd.f32 %v270, %v401
      %403 = vmatmul.f32.gmra.mxu0 %v189
      %v404 = vpop.f32.mrf.mxu0
      %v405 = vadd.f32 %v270, %v404
      %406 = vmatmul.f32.gmra.mxu0 %v191
      %v407 = vpop.f32.mrf.mxu0
      %v408 = vadd.f32 %v270, %v407
      %409 = vmatmul.f32.gmra.mxu0 %v193
      %v410 = vpop.f32.mrf.mxu0
      %v411 = vadd.f32 %v270, %v410
      %412 = vmatmul.f32.gmra.mxu0 %v195
      %v413 = vpop.f32.mrf.mxu0
      %v414 = vadd.f32 %v270, %v413
      %415 = vmatmul.f32.gmra.mxu0 %v197
      %v416 = vpop.f32.mrf.mxu0
      %v417 = vadd.f32 %v270, %v416
      %418 = vmatmul.f32.gmra.mxu0 %v199
      %v419 = vpop.f32.mrf.mxu0
      %v420 = vadd.f32 %v270, %v419
      %421 = vmatmul.f32.gmra.mxu0 %v201
      %v422 = vpop.f32.mrf.mxu0
      %v423 = vadd.f32 %v270, %v422
      %424 = vmatmul.f32.gmra.mxu0 %v203
      %v425 = vpop.f32.mrf.mxu0
      %v426 = vadd.f32 %v270, %v425
      %427 = vmatmul.f32.gmra.mxu0 %v205
      %v428 = vpop.f32.mrf.mxu0
      %v429 = vadd.f32 %v270, %v428
      %430 = vmatmul.f32.gmra.mxu0 %v207
      %v431 = vpop.f32.mrf.mxu0
      %v432 = vadd.f32 %v270, %v431
      %433 = vmatmul.f32.gmra.mxu0 %v209
      %v434 = vpop.f32.mrf.mxu0
      %v435 = vadd.f32 %v270, %v434
      %436 = vmatmul.f32.gmra.mxu0 %v211
      %v437 = vpop.f32.mrf.mxu0
      %v438 = vadd.f32 %v270, %v437
      %439 = vmatmul.f32.gmra.mxu0 %v213
      %v440 = vpop.f32.mrf.mxu0
      %v441 = vadd.f32 %v270, %v440
      %442 = vmatmul.f32.gmra.mxu0 %v215
      %v443 = vpop.f32.mrf.mxu0
      %v444 = vadd.f32 %v270, %v443
      %445 = vmatmul.f32.gmra.mxu0 %v217
      %v446 = vpop.f32.mrf.mxu0
      %v447 = vadd.f32 %v270, %v446
      %448 = vmatmul.f32.gmra.mxu0 %v219
      %v449 = vpop.f32.mrf.mxu0
      %v450 = vadd.f32 %v270, %v449
      %451 = vmatmul.f32.gmra.mxu0 %v221
      %v452 = vpop.f32.mrf.mxu0
      %v453 = vadd.f32 %v270, %v452
      %454 = vmatmul.f32.gmra.mxu0 %v223
      %v455 = vpop.f32.mrf.mxu0
      %v456 = vadd.f32 %v270, %v455
      %457 = vmatmul.f32.gmra.mxu0 %v225
      %v458 = vpop.f32.mrf.mxu0
      %v459 = vadd.f32 %v270, %v458
      %460 = vmatmul.f32.gmra.mxu0 %v227
      %v461 = vpop.f32.mrf.mxu0
      %v462 = vadd.f32 %v270, %v461
      %463 = vmatmul.f32.gmra.mxu0 %v229
      %v464 = vpop.f32.mrf.mxu0
      %v465 = vadd.f32 %v270, %v464
      %466 = vmatmul.f32.gmra.mxu0 %v231
      %v467 = vpop.f32.mrf.mxu0
      %v468 = vadd.f32 %v270, %v467
      %469 = vmatmul.f32.gmra.mxu0 %v233
      %v470 = vpop.f32.mrf.mxu0
      %v471 = vadd.f32 %v270, %v470
      %472 = vmatmul.f32.gmra.mxu0 %v235
      %v473 = vpop.f32.mrf.mxu0
      %v474 = vadd.f32 %v270, %v473
      %475 = vmatmul.f32.gmra.mxu0 %v237
      %v476 = vpop.f32.mrf.mxu0
      %v477 = vadd.f32 %v270, %v476
      %478 = vmatmul.f32.gmra.mxu0 %v239
      %v479 = vpop.f32.mrf.mxu0
      %v480 = vadd.f32 %v270, %v479
      %481 = vdwg.mxu0
      %482 = vmatpush.msra.mxu0 0.0
      %483 = vmatpush.msra.mxu0 0.0
      %484 = vmatpush.msra.mxu0 0.0
      %485 = vmatpush.msra.mxu0 0.0
      %486 = vmatpush.msra.mxu0 0.0
      %487 = vmatpush.msra.mxu0 %v267
      %488 = vmatpush.msra.mxu0 %v266
      %489 = vmatpush.msra.mxu0 %v265
      %490 = vmatpush.msra.mxu0 %v264
      %491 = vmatpush.msra.mxu0 %v263
      %492 = vmatpush.msra.mxu0 %v262
      %493 = vmatpush.msra.mxu0 %v261
      %494 = vmatpush.msra.mxu0 %v260
      %495 = vmatpush.msra.mxu0 %v259
      %496 = vmatpush.msra.mxu0 %v258
      %497 = vmatpush.msra.mxu0 %v257
      %498 = vmatmul.f32.gmra.mxu0 %v274
      %v499 = vpop.f32.mrf.mxu0
      %v500 = vadd.f32 %v387, %v499
      %501 = vmatmul.f32.gmra.mxu0 %v277
      %v502 = vpop.f32.mrf.mxu0
      %v503 = vadd.f32 %v390, %v502
      %504 = vmatmul.f32.gmra.mxu0 %v280
      %v505 = vpop.f32.mrf.mxu0
      %v506 = vadd.f32 %v393, %v505
      %507 = vmatmul.f32.gmra.mxu0 %v283
      %v508 = vpop.f32.mrf.mxu0
      %v509 = vadd.f32 %v396, %v508
      %510 = vmatmul.f32.gmra.mxu0 %v286
      %v511 = vpop.f32.mrf.mxu0
      %v512 = vadd.f32 %v399, %v511
      %513 = vmatmul.f32.gmra.mxu0 %v289
      %v514 = vpop.f32.mrf.mxu0
      %v515 = vadd.f32 %v402, %v514
      %516 = vmatmul.f32.gmra.mxu0 %v292
      %v517 = vpop.f32.mrf.mxu0
      %v518 = vadd.f32 %v405, %v517
      %519 = vmatmul.f32.gmra.mxu0 %v295
      %v520 = vpop.f32.mrf.mxu0
      %v521 = vadd.f32 %v408, %v520
      %522 = vmatmul.f32.gmra.mxu0 %v298
      %v523 = vpop.f32.mrf.mxu0
      %v524 = vadd.f32 %v411, %v523
      %525 = vmatmul.f32.gmra.mxu0 %v301
      %v526 = vpop.f32.mrf.mxu0
      %v527 = vadd.f32 %v414, %v526
      %528 = vmatmul.f32.gmra.mxu0 %v304
      %v529 = vpop.f32.mrf.mxu0
      %v530 = vadd.f32 %v417, %v529
      %531 = vmatmul.f32.gmra.mxu0 %v307
      %v532 = vpop.f32.mrf.mxu0
      %v533 = vadd.f32 %v420, %v532
      %534 = vmatmul.f32.gmra.mxu0 %v310
      %v535 = vpop.f32.mrf.mxu0
      %v536 = vadd.f32 %v423, %v535
      %537 = vmatmul.f32.gmra.mxu0 %v313
      %v538 = vpop.f32.mrf.mxu0
      %v539 = vadd.f32 %v426, %v538
      %540 = vmatmul.f32.gmra.mxu0 %v316
      %v541 = vpop.f32.mrf.mxu0
      %v542 = vadd.f32 %v429, %v541
      %543 = vmatmul.f32.gmra.mxu0 %v319
      %v544 = vpop.f32.mrf.mxu0
      %v545 = vadd.f32 %v432, %v544
      %546 = vmatmul.f32.gmra.mxu0 %v322
      %v547 = vpop.f32.mrf.mxu0
      %v548 = vadd.f32 %v435, %v547
      %549 = vmatmul.f32.gmra.mxu0 %v325
      %v550 = vpop.f32.mrf.mxu0
      %v551 = vadd.f32 %v438, %v550
      %552 = vmatmul.f32.gmra.mxu0 %v328
      %v553 = vpop.f32.mrf.mxu0
      %v554 = vadd.f32 %v441, %v553
      %555 = vmatmul.f32.gmra.mxu0 %v331
      %v556 = vpop.f32.mrf.mxu0
      %v557 = vadd.f32 %v444, %v556
      %558 = vmatmul.f32.gmra.mxu0 %v334
      %v559 = vpop.f32.mrf.mxu0
      %v560 = vadd.f32 %v447, %v559
      %561 = vmatmul.f32.gmra.mxu0 %v337
      %v562 = vpop.f32.mrf.mxu0
      %v563 = vadd.f32 %v450, %v562
      %564 = vmatmul.f32.gmra.mxu0 %v340
      %v565 = vpop.f32.mrf.mxu0
      %v566 = vadd.f32 %v453, %v565
      %567 = vmatmul.f32.gmra.mxu0 %v343
      %v568 = vpop.f32.mrf.mxu0
      %v569 = vadd.f32 %v456, %v568
      %570 = vmatmul.f32.gmra.mxu0 %v346
      %v571 = vpop.f32.mrf.mxu0
      %v572 = vadd.f32 %v459, %v571
      %573 = vmatmul.f32.gmra.mxu0 %v349
      %v574 = vpop.f32.mrf.mxu0
      %v575 = vadd.f32 %v462, %v574
      %576 = vmatmul.f32.gmra.mxu0 %v352
      %v577 = vpop.f32.mrf.mxu0
      %v578 = vadd.f32 %v465, %v577
      %579 = vmatmul.f32.gmra.mxu0 %v355
      %v580 = vpop.f32.mrf.mxu0
      %v581 = vadd.f32 %v468, %v580
      %582 = vmatmul.f32.gmra.mxu0 %v358
      %v583 = vpop.f32.mrf.mxu0
      %v584 = vadd.f32 %v471, %v583
      %585 = vmatmul.f32.gmra.mxu0 %v361
      %v586 = vpop.f32.mrf.mxu0
      %v587 = vadd.f32 %v474, %v586
      %588 = vmatmul.f32.gmra.mxu0 %v364
      %v589 = vpop.f32.mrf.mxu0
      %v590 = vadd.f32 %v477, %v589
      %591 = vmatmul.f32.gmra.mxu0 %v367
      %v592 = vpop.f32.mrf.mxu0
      %v593 = vadd.f32 %v480, %v592
      %594 = vdwg.mxu0
      %vm595 = vcmask 64512
      %596 = vst.msk [vmem:[%s175] sm:$0xff] %vm595, %v500
      %597 = vst.msk [vmem:[%s175 + $0x8] sm:$0xff] %vm595, %v503
      %598 = vst.msk [vmem:[%s175 + $0x10] sm:$0xff] %vm595, %v506
      %599 = vst.msk [vmem:[%s175 + $0x18] sm:$0xff] %vm595, %v509
      %600 = vst.msk [vmem:[%s175 + $0x20] sm:$0xff] %vm595, %v512
      %601 = vst.msk [vmem:[%s175 + $0x28] sm:$0xff] %vm595, %v515
      %602 = vst.msk [vmem:[%s175 + $0x30] sm:$0xff] %vm595, %v518
      %603 = vst.msk [vmem:[%s175 + $0x38] sm:$0xff] %vm595, %v521
      %604 = vst.msk [vmem:[%s175 + $0x40] sm:$0xff] %vm595, %v524
      %605 = vst.msk [vmem:[%s175 + $0x48] sm:$0xff] %vm595, %v527
      %606 = vst.msk [vmem:[%s175 + $0x50] sm:$0xff] %vm595, %v530
      %607 = vst.msk [vmem:[%s175 + $0x58] sm:$0xff] %vm595, %v533
      %608 = vst.msk [vmem:[%s175 + $0x60] sm:$0xff] %vm595, %v536
      %609 = vst.msk [vmem:[%s175 + $0x68] sm:$0xff] %vm595, %v539
      %610 = vst.msk [vmem:[%s175 + $0x70] sm:$0xff] %vm595, %v542
      %611 = vst.msk [vmem:[%s175 + $0x78] sm:$0xff] %vm595, %v545
      %612 = vst.msk [vmem:[%s175 + $0x80] sm:$0xff] %vm595, %v548
      %613 = vst.msk [vmem:[%s175 + $0x88] sm:$0xff] %vm595, %v551
      %614 = vst.msk [vmem:[%s175 + $0x90] sm:$0xff] %vm595, %v554
      %615 = vst.msk [vmem:[%s175 + $0x98] sm:$0xff] %vm595, %v557
      %616 = vst.msk [vmem:[%s175 + $0xa0] sm:$0xff] %vm595, %v560
      %617 = vst.msk [vmem:[%s175 + $0xa8] sm:$0xff] %vm595, %v563
      %618 = vst.msk [vmem:[%s175 + $0xb0] sm:$0xff] %vm595, %v566
      %619 = vst.msk [vmem:[%s175 + $0xb8] sm:$0xff] %vm595, %v569
      %620 = vst.msk [vmem:[%s175 + $0xc0] sm:$0xff] %vm595, %v572
      %621 = vst.msk [vmem:[%s175 + $0xc8] sm:$0xff] %vm595, %v575
      %622 = vst.msk [vmem:[%s175 + $0xd0] sm:$0xff] %vm595, %v578
      %623 = vst.msk [vmem:[%s175 + $0xd8] sm:$0xff] %vm595, %v581
      %624 = vst.msk [vmem:[%s175 + $0xe0] sm:$0xff] %vm595, %v584
      %625 = vst.msk [vmem:[%s175 + $0xe8] sm:$0xff] %vm595, %v587
      %626 = vst.msk [vmem:[%s175 + $0xf0] sm:$0xff] %vm595, %v590
      %627 = vst.msk [vmem:[%s175 + $0xf8] sm:$0xff] %vm595, %v593
      %s628 = smul.u32 32, %s14
      %p629 = scmp.lt.s32.totalorder %s628, 63
      %s630 = scalar_select %p629, %s628, 63
      %s631 = smul.addr %s630, 8
      %s632 = scalar_lea.vmem %s3, %s631
      // Predicated region
      $region33: #{meta_ms_forward.4} parent=31 // pred_check
        %p633 = pneg %p100
      $region34: #{meta_ms_forward.4} parent=31 // pred_check_branch
        %635 = sbr.rel (%p633) target = $region36
      $region35: #{meta_ms_forward.4} parent=31 // pred_region
        %s636 = smul.u32 32, %s14
      $region36: #{meta_ms_forward.4} parent=31 // pred_fallthru
        _
    $region32: #{meta_ms_forward.4} parent=5 // pred_fallthru
      _
    %p637 = scmp.le.s32.totalorder 2, %s9
    // Predicated region
    $region37: #{meta_ms_forward.4} parent=5 // pred_check
      %p638 = pneg %p637
    $region38: #{meta_ms_forward.4} parent=5 // pred_check_branch
      %640 = sbr.rel (%p638) target = $region40
    $region39: #{meta_ms_forward.4} parent=5 // pred_region
      %s641 = ssub.s32 %s9, 2
      // Predicated region
      $region41: #{meta_ms_forward.4} parent=39 // pred_check
        %p642 = pneg %p106
      $region42: #{meta_ms_forward.4} parent=39 // pred_check_branch
        %644 = sbr.rel (%p642) target = $region44
      $region43: #{meta_ms_forward.4} parent=39 // pred_region
        %s645 = smul.u32 32, %s15
        %p646 = scmp.lt.s32.totalorder %s645, 63
        %s647 = scalar_select %p646, %s645, 63
        %s648 = smul.addr %s647, 8
        %s649 = scalar_lea.vmem %s3, %s648
      $region44: #{meta_ms_forward.4} parent=39 // pred_fallthru
        _
    $region40: #{meta_ms_forward.4} parent=5 // pred_fallthru
      _
  $region6: #{meta_ms_forward.4} parent=0 // loop_footer
    %s13 = sadd.s32 1, %s9
  $region7: #{meta_ms_forward.4} parent=0 // loop_footer_branch
    %8 = sbr.rel target = $region3
  $region8: #{meta_ms_forward.4} parent=0 // loop_exit
    _

// kernel: meta_ms_forward.5
$region0: #{meta_ms_forward.5}
  #allocation0 [shape = 'u32[]', space=smem, size = 0x4, offset = 0x4, fixed_abs, tag = 'smem constant byte address 0x4 - core index']
  #allocation1 [shape = 'u32[72,128]{1,0:T(1,128)}', space=vmem, size = 0x9000, scoped, tag = 'internal scratch']
  %s0 = inlined_call_operand.vmem [shape: f32[2,256,8], index: 0, kind: input, shape index: {}]
  %s1 = inlined_call_operand.vmem [shape: f32[2,256,8], index: 1, kind: input, shape index: {}, may-alias: {1,4}]
  %s2 = inlined_call_operand.vmem [shape: f32[8,4], index: 2, kind: input, shape index: {}]
  %s3 = inlined_call_operand.vmem [shape: f32[4,8], index: 3, kind: input, shape index: {}]
  %s4 = inlined_call_operand.vmem [shape: f32[2,256,8], index: 4, kind: output, shape index: {}, may-alias: {1,4}]
  %s5 = sld [smem:[#allocation0]]
  $region49: #{meta_ms_forward.5} parent=0
    _
  %s7 = ssub.s32 1, %s5
  %s8 = scalar_select 0, %s7, %s5
  loop: start=0, step=1, limit=4
  $region2: #{meta_ms_forward.5} parent=0 // loop_pre_header
    _
  $region3: #{meta_ms_forward.5} parent=0 // loop_header
    %s10 = sphi 0, %s14
    %p11 = scmp.ge.s32.totalorder %s10, 4
    %s20 = sphi 0, %s22
    %s23 = sphi 0, %s20
    %s24 = sphi 0, %s23
    %s40 = sphi 0, %s24
    %s46 = sphi 0, %s48
    %s49 = sphi 0, %s46
    %s50 = sphi 0, %s49
    %s66 = sphi 0, %s50
    %s70 = sphi 0, %s70
    %s72 = sphi 0, %s70
    %s73 = sphi 0, %s72
    %s87 = sphi 0, %s73
    %s91 = sphi 0, %s91
    %s93 = sphi 0, %s91
    %s94 = sphi 0, %s93
    %s108 = sphi 0, %s94
    %s114 = sphi 0, %s116
    %s117 = sphi 0, %s114
    %s118 = sphi 0, %s117
    %s134 = sphi 0, %s118
  $region4: #{meta_ms_forward.5} parent=0 // loop_header_branch
    %13 = sbr.rel (%p11) target = $region8
  $region5: #{meta_ms_forward.5} parent=0 // loop_body
    %s15 = ssub.s32 %s10, 1
    %s16 = ssub.s32 %s10, 2
    %s17 = sadd.s32 %s10, 1
    %s18 = ssub.s32 %s10, %s17
    %p19 = scmp.eq.s32.totalorder %s18, 0
    %s21 = sadd.s32 %s20, 1
    %s22 = scalar_select %p19, %s20, %s21
    %p25 = pneg %p19
    %p26 = scmp.eq.s32.totalorder %s10, 1
    %p27 = por %p25, %p26
    %p28 = scmp.ne.s32.totalorder %s20, %s23
    %p29 = scmp.eq.s32.totalorder %s10, 0
    %p30 = por %p28, %p29
    %p31 = scmp.ne.s32.totalorder %s20, %s23
    %p32 = scmp.eq.s32.totalorder %s15, 1
    %p33 = por %p31, %p32
    %p34 = scmp.ne.s32.totalorder %s23, %s24
    %p35 = scmp.eq.s32.totalorder %s15, 0
    %p36 = por %p34, %p35
    %p37 = scmp.ne.s32.totalorder %s23, %s24
    %p38 = scmp.eq.s32.totalorder %s16, 1
    %p39 = por %p37, %p38
    %p41 = scmp.ne.s32.totalorder %s24, %s40
    %p42 = scmp.eq.s32.totalorder %s16, 0
    %p43 = por %p41, %p42
    %s44 = ssub.s32 %s10, %s17
    %p45 = scmp.eq.s32.totalorder %s44, 0
    %s47 = sadd.s32 %s46, 1
    %s48 = scalar_select %p45, %s46, %s47
    %p51 = pneg %p45
    %p52 = scmp.eq.s32.totalorder %s10, 1
    %p53 = por %p51, %p52
    %p54 = scmp.ne.s32.totalorder %s46, %s49
    %p55 = scmp.eq.s32.totalorder %s10, 0
    %p56 = por %p54, %p55
    %p57 = scmp.ne.s32.totalorder %s46, %s49
    %p58 = scmp.eq.s32.totalorder %s15, 1
    %p59 = por %p57, %p58
    %p60 = scmp.ne.s32.totalorder %s49, %s50
    %p61 = scmp.eq.s32.totalorder %s15, 0
    %p62 = por %p60, %p61
    %p63 = scmp.ne.s32.totalorder %s49, %s50
    %p64 = scmp.eq.s32.totalorder %s16, 1
    %p65 = por %p63, %p64
    %p67 = scmp.ne.s32.totalorder %s50, %s66
    %p68 = scmp.eq.s32.totalorder %s16, 0
    %p69 = por %p67, %p68
    %s71 = sadd.s32 %s70, 1
    %p74 = scmp.eq.s32.totalorder %s10, 1
    %p75 = scmp.ne.s32.totalorder %s70, %s72
    %p76 = scmp.eq.s32.totalorder %s10, 0
    %p77 = por %p75, %p76
    %p78 = scmp.ne.s32.totalorder %s70, %s72
    %p79 = scmp.eq.s32.totalorder %s15, 1
    %p80 = por %p78, %p79
    %p81 = scmp.ne.s32.totalorder %s72, %s73
    %p82 = scmp.eq.s32.totalorder %s15, 0
    %p83 = por %p81, %p82
    %p84 = scmp.ne.s32.totalorder %s72, %s73
    %p85 = scmp.eq.s32.totalorder %s16, 1
    %p86 = por %p84, %p85
    %p88 = scmp.ne.s32.totalorder %s73, %s87
    %p89 = scmp.eq.s32.totalorder %s16, 0
    %p90 = por %p88, %p89
    %s92 = sadd.s32 %s91, 1
    %p95 = scmp.eq.s32.totalorder %s10, 1
    %p96 = scmp.ne.s32.totalorder %s91, %s93
    %p97 = scmp.eq.s32.totalorder %s10, 0
    %p98 = por %p96, %p97
    %p99 = scmp.ne.s32.totalorder %s91, %s93
    %p100 = scmp.eq.s32.totalorder %s15, 1
    %p101 = por %p99, %p100
    %p102 = scmp.ne.s32.totalorder %s93, %s94
    %p103 = scmp.eq.s32.totalorder %s15, 0
    %p104 = por %p102, %p103
    %p105 = scmp.ne.s32.totalorder %s93, %s94
    %p106 = scmp.eq.s32.totalorder %s16, 1
    %p107 = por %p105, %p106
    %p109 = scmp.ne.s32.totalorder %s94, %s108
    %p110 = scmp.eq.s32.totalorder %s16, 0
    %p111 = por %p109, %p110
    %s112 = ssub.s32 %s10, %s17
    %p113 = scmp.eq.s32.totalorder %s112, 0
    %s115 = sadd.s32 %s114, 1
    %s116 = scalar_select %p113, %s114, %s115
    %p119 = pneg %p113
    %p120 = scmp.eq.s32.totalorder %s10, 1
    %p121 = por %p119, %p120
    %p122 = scmp.ne.s32.totalorder %s114, %s117
    %p123 = scmp.eq.s32.totalorder %s10, 0
    %p124 = por %p122, %p123
    %p125 = scmp.ne.s32.totalorder %s114, %s117
    %p126 = scmp.eq.s32.totalorder %s15, 1
    %p127 = por %p125, %p126
    %p128 = scmp.ne.s32.totalorder %s117, %s118
    %p129 = scmp.eq.s32.totalorder %s15, 0
    %p130 = por %p128, %p129
    %p131 = scmp.ne.s32.totalorder %s117, %s118
    %p132 = scmp.eq.s32.totalorder %s16, 1
    %p133 = por %p131, %p132
    %p135 = scmp.ne.s32.totalorder %s118, %s134
    %p136 = scmp.eq.s32.totalorder %s16, 0
    %p137 = por %p135, %p136
    %p138 = scmp.le.s32.totalorder 1, %s10
    %p139 = scmp.lt.s32.totalorder %s10, 3
    %p140 = pnand %p138, %p139
    %p141 = pneg %p140
    // Predicated region
    $region9: #{meta_ms_forward.5} parent=5 // pred_check
      _
    $region10: #{meta_ms_forward.5} parent=5 // pred_check_branch
      %143 = sbr.rel (%p140) target = $region12
    $region11: #{meta_ms_forward.5} parent=5 // pred_region
      %s144 = ssub.s32 %s10, 1
      // Predicated region
      $region13: #{meta_ms_forward.5} parent=11 // pred_check
        %p145 = pneg %p83
      $region14: #{meta_ms_forward.5} parent=11 // pred_check_branch
        %147 = sbr.rel (%p145) target = $region16
      $region15: #{meta_ms_forward.5} parent=11 // pred_region
        _
      $region16: #{meta_ms_forward.5} parent=11 // pred_fallthru
        _
      // Predicated region
      $region17: #{meta_ms_forward.5} parent=11 // pred_check
        %p148 = pneg %p104
      $region18: #{meta_ms_forward.5} parent=11 // pred_check_branch
        %150 = sbr.rel (%p148) target = $region20
      $region19: #{meta_ms_forward.5} parent=11 // pred_region
        _
      $region20: #{meta_ms_forward.5} parent=11 // pred_fallthru
        _
    $region12: #{meta_ms_forward.5} parent=5 // pred_fallthru
      _
    %p151 = scmp.lt.s32.totalorder %s10, 2
    // Predicated region
    $region21: #{meta_ms_forward.5} parent=5 // pred_check
      %p152 = pneg %p151
    $region22: #{meta_ms_forward.5} parent=5 // pred_check_branch
      %154 = sbr.rel (%p152) target = $region24
    $region23: #{meta_ms_forward.5} parent=5 // pred_region
      // Predicated region
      $region25: #{meta_ms_forward.5} parent=23 // pred_check
        %p155 = pneg %p30
      $region26: #{meta_ms_forward.5} parent=23 // pred_check_branch
        %157 = sbr.rel (%p155) target = $region28
      $region27: #{meta_ms_forward.5} parent=23 // pred_region
        %p158 = scmp.lt.s32.totalorder %s10, 1
        %s159 = scalar_select %p158, %s10, 1
        %s160 = smul.addr %s159, 32
        %s161 = smul.addr %s160, 8
        %s162 = scalar_lea.vmem %s0, %s161
      $region28: #{meta_ms_forward.5} parent=23 // pred_fallthru
        _
      // Predicated region
      $region29: #{meta_ms_forward.5} parent=23 // pred_check
        %p163 = pneg %p56
      $region30: #{meta_ms_forward.5} parent=23 // pred_check_branch
        %165 = sbr.rel (%p163) target = $region32
      $region31: #{meta_ms_forward.5} parent=23 // pred_region
        %p166 = scmp.lt.s32.totalorder %s10, 1
        %s167 = scalar_select %p166, %s10, 1
        %s168 = smul.addr %s167, 32
        %s169 = smul.addr %s168, 8
        %s170 = scalar_lea.vmem %s1, %s169
      $region32: #{meta_ms_forward.5} parent=23 // pred_fallthru
        _
    $region24: #{meta_ms_forward.5} parent=5 // pred_fallthru
      _
    %p171 = scmp.le.s32.totalorder 1, %s10
    %p172 = scmp.lt.s32.totalorder %s10, 3
    %p173 = pnand %p171, %p172
    %p174 = pneg %p173
    // Predicated region
    $region33: #{meta_ms_forward.5} parent=5 // pred_check
      _
    $region34: #{meta_ms_forward.5} parent=5 // pred_check_branch
      %176 = sbr.rel (%p173) target = $region36
    $region35: #{meta_ms_forward.5} parent=5 // pred_region
      %s177 = ssub.s32 %s10, 1
      %p178 = scmp.lt.s32.totalorder %s15, 1
      %s179 = scalar_select %p178, %s15, 1
      %s180 = smul.addr %s179, 32
      %s181 = smul.addr %s180, 8
      %s182 = scalar_lea.vmem %s0, %s181
      %p183 = pneg %p36
      %p184 = pneg %p33
      %p185 = scmp.lt.s32.totalorder %s15, 1
      %s186 = scalar_select %p185, %s15, 1
      %s187 = smul.addr %s186, 32
      %s188 = smul.addr %s187, 8
      %s189 = scalar_lea.vmem %s1, %s188
      %p190 = pneg %p62
      %p191 = pneg %p59
      %p192 = pneg %p83
      %p193 = pneg %p80
      %p194 = pneg %p104
      %p195 = pneg %p101
      %p196 = pneg %p130
      %p197 = pneg %p127
      %p198 = scmp.lt.s32.totalorder %s15, 1
      %s199 = scalar_select %p198, %s15, 1
      %s200 = smul.addr %s199, 32
      %s201 = smul.addr %s200, 8
      %s202 = scalar_lea.vmem %s4, %s201
      %p203 = scmp.lt.s32.totalorder %s15, 1
      %s204 = scalar_select %p203, %s15, 1
      %s205 = smul.addr %s204, 32
      %s206 = smul.addr %s205, 8
      %s207 = scalar_lea.vmem %s0, %s206
      %p208 = scmp.lt.s32.totalorder %s15, 1
      %s209 = scalar_select %p208, %s15, 1
      %s210 = smul.addr %s209, 32
      %s211 = smul.addr %s210, 8
      %s212 = scalar_lea.vmem %s1, %s211
      %p213 = scmp.lt.s32.totalorder %s15, 1
      %s214 = scalar_select %p213, %s15, 1
      %s215 = smul.addr %s214, 32
      %s216 = smul.addr %s215, 8
      %s217 = scalar_lea.vmem %s4, %s216
      %v218 = vld [vmem:[%s207] sm:$0xff]
      %v219 = vld [vmem:[%s207 + $0x8] sm:$0xff]
      %v220 = vld [vmem:[%s207 + $0x10] sm:$0xff]
      %v221 = vld [vmem:[%s207 + $0x18] sm:$0xff]
      %v222 = vld [vmem:[%s207 + $0x20] sm:$0xff]
      %v223 = vld [vmem:[%s207 + $0x28] sm:$0xff]
      %v224 = vld [vmem:[%s207 + $0x30] sm:$0xff]
      %v225 = vld [vmem:[%s207 + $0x38] sm:$0xff]
      %v226 = vld [vmem:[%s207 + $0x40] sm:$0xff]
      %v227 = vld [vmem:[%s207 + $0x48] sm:$0xff]
      %v228 = vld [vmem:[%s207 + $0x50] sm:$0xff]
      %v229 = vld [vmem:[%s207 + $0x58] sm:$0xff]
      %v230 = vld [vmem:[%s207 + $0x60] sm:$0xff]
      %v231 = vld [vmem:[%s207 + $0x68] sm:$0xff]
      %v232 = vld [vmem:[%s207 + $0x70] sm:$0xff]
      %v233 = vld [vmem:[%s207 + $0x78] sm:$0xff]
      %v234 = vld [vmem:[%s207 + $0x80] sm:$0xff]
      %v235 = vld [vmem:[%s207 + $0x88] sm:$0xff]
      %v236 = vld [vmem:[%s207 + $0x90] sm:$0xff]
      %v237 = vld [vmem:[%s207 + $0x98] sm:$0xff]
      %v238 = vld [vmem:[%s207 + $0xa0] sm:$0xff]
      %v239 = vld [vmem:[%s207 + $0xa8] sm:$0xff]
      %v240 = vld [vmem:[%s207 + $0xb0] sm:$0xff]
      %v241 = vld [vmem:[%s207 + $0xb8] sm:$0xff]
      %v242 = vld [vmem:[%s207 + $0xc0] sm:$0xff]
      %v243 = vld [vmem:[%s207 + $0xc8] sm:$0xff]
      %v244 = vld [vmem:[%s207 + $0xd0] sm:$0xff]
      %v245 = vld [vmem:[%s207 + $0xd8] sm:$0xff]
      %v246 = vld [vmem:[%s207 + $0xe0] sm:$0xff]
      %v247 = vld [vmem:[%s207 + $0xe8] sm:$0xff]
      %v248 = vld [vmem:[%s207 + $0xf0] sm:$0xff]
      %v249 = vld [vmem:[%s207 + $0xf8] sm:$0xff]
      %250 = vmatpush.msra.mxu0 %v233
      %251 = vmatpush.msra.mxu0 %v232
      %252 = vmatpush.msra.mxu0 %v231
      %253 = vmatpush.msra.mxu0 %v230
      %254 = vmatpush.msra.mxu0 %v229
      %255 = vmatpush.msra.mxu0 %v228
      %256 = vmatpush.msra.mxu0 %v227
      %257 = vmatpush.msra.mxu0 %v226
      %258 = vmatpush.msra.mxu0 %v225
      %259 = vmatpush.msra.mxu0 %v224
      %260 = vmatpush.msra.mxu0 %v223
      %261 = vmatpush.msra.mxu0 %v222
      %262 = vmatpush.msra.mxu0 %v221
      %263 = vmatpush.msra.mxu0 %v220
      %264 = vmatpush.msra.mxu0 %v219
      %265 = vmatpush.msra.mxu0 %v218
      %266 = vmatmul.f32.gmra.mxu0 1.0
      %v267 = vpop.f32.mrf.mxu0
      %v268 = vadd.f32 0.0, %v267
      %269 = vdwg.mxu0
      %270 = vmatpush.msra.mxu0 %v249
      %271 = vmatpush.msra.mxu0 %v248
      %272 = vmatpush.msra.mxu0 %v247
      %273 = vmatpush.msra.mxu0 %v246
      %274 = vmatpush.msra.mxu0 %v245
      %275 = vmatpush.msra.mxu0 %v244
      %276 = vmatpush.msra.mxu0 %v243
      %277 = vmatpush.msra.mxu0 %v242
      %278 = vmatpush.msra.mxu0 %v241
      %279 = vmatpush.msra.mxu0 %v240
      %280 = vmatpush.msra.mxu0 %v239
      %281 = vmatpush.msra.mxu0 %v238
      %282 = vmatpush.msra.mxu0 %v237
      %283 = vmatpush.msra.mxu0 %v236
      %284 = vmatpush.msra.mxu0 %v235
      %285 = vmatpush.msra.mxu0 %v234
      %286 = vmatmul.f32.gmra.mxu0 1.0
      %v287 = vpop.f32.mrf.mxu0
      %v288 = vadd.f32 %v268, %v287
      %289 = vdwg.mxu0
      %v290 = vmul.f32 %v288, 0.00390625
      %v291 = vld [vmem:[%s2] sm:$0xff]
      %vm292 = vcmask 64512
      %v294 = vsel %vm292, %v290, 0
      %296 = vmatpush.msra.mxu0 0.0
      %297 = vmatpush.msra.mxu0 0.0
      %298 = vmatpush.msra.mxu0 0.0
      %299 = vmatpush.msra.mxu0 0.0
      %300 = vmatpush.msra.mxu0 0.0
      %301 = vmatpush.msra.mxu0 0.0
      %302 = vmatpush.msra.mxu0 0.0
      %303 = vmatpush.msra.mxu0 0.0
      %304 = vmatpush.msra.mxu0 0.0
      %305 = vmatpush.msra.mxu0 0.0
      %306 = vmatpush.msra.mxu0 0.0
      %307 = vmatpush.msra.mxu0 0.0
      %308 = vmatpush.msra.mxu0 0.0
      %309 = vmatpush.msra.mxu0 0.0
      %310 = vmatpush.msra.mxu0 0.0
      %311 = vmatpush.msra.mxu0 %v291
      %312 = vmatmul.f32.gmra.mxu0 %v294
      %v313 = vpop.f32.mrf.mxu0
      %v314 = vadd.f32 0.0, %v313
      %315 = vdwg.mxu0
      %v316 = vmax.f32 %v314, 0.0
      %v317 = vld [vmem:[%s3] sm:$0xf]
      %vm318 = vcmask 31744
      %v320 = vsel %vm318, %v316, 0
      %vm322 = vcmask 1043456
      %v324 = vsel %vm322, %v317, 0
      %326 = vmatpush.msra.mxu0 0.0
      %327 = vmatpush.msra.mxu0 0.0
      %328 = vmatpush.msra.mxu0 0.0
      %329 = vmatpush.msra.mxu0 0.0
      %330 = vmatpush.msra.mxu0 0.0
      %331 = vmatpush.msra.mxu0 0.0
      %332 = vmatpush.msra.mxu0 0.0
      %333 = vmatpush.msra.mxu0 0.0
      %334 = vmatpush.msra.mxu0 0.0
      %335 = vmatpush.msra.mxu0 0.0
      %336 = vmatpush.msra.mxu0 0.0
      %337 = vmatpush.msra.mxu0 0.0
      %338 = vmatpush.msra.mxu0 0.0
      %339 = vmatpush.msra.mxu0 0.0
      %340 = vmatpush.msra.mxu0 0.0
      %341 = vmatpush.msra.mxu0 %v324
      %342 = vmatmul.f32.gmra.mxu0 %v320
      %v343 = vpop.f32.mrf.mxu0
      %v344 = vadd.f32 0.0, %v343
      %345 = vdwg.mxu0
      %v346 = vsub.f32 0.0, %v344
      %v347 = vmul.f32 %v346, 1.442695
      %v348 = vpow.pop %v347
      %v349 = vadd.f32 %v348, 1.0
      %v350 = vrcp.pop %v349
      %v351 = vmul.f32 %v349, %v350
      %v352 = vsub.f32 1.0, %v351
      %v353 = vmul.f32 %v350, %v352
      %v354 = vadd.f32 %v350, %v353
      %vm355 = vweird.f32 %v349
      %vm356 = vweird.f32 %v350
      %vm357 = vmor %vm355, %vm356
      %v358 = vsel %vm357, %v350, %v354
      %v359 = vand.u32 2147483647, %v349
      %vm360 = vcmp.eq.f32.partialorder %v359, 8.507059e+37
      %v361 = vand.u32 %v349, 2147483648
      %v362 = vor.u32 1.1754944e-38, %v361
      %v363 = vsel %vm360, %v362, %v358
      %v364 = vmul.f32 1.0, %v363
      %v365 = vld [vmem:[%s212] sm:$0xff]
      %v366 = vld [vmem:[%s212 + $0x8] sm:$0xff]
      %v367 = vld [vmem:[%s212 + $0x10] sm:$0xff]
      %v368 = vld [vmem:[%s212 + $0x18] sm:$0xff]
      %v369 = vld [vmem:[%s212 + $0x20] sm:$0xff]
      %v370 = vld [vmem:[%s212 + $0x28] sm:$0xff]
      %v371 = vld [vmem:[%s212 + $0x30] sm:$0xff]
      %v372 = vld [vmem:[%s212 + $0x38] sm:$0xff]
      %v373 = vld [vmem:[%s212 + $0x40] sm:$0xff]
      %v374 = vld [vmem:[%s212 + $0x48] sm:$0xff]
      %v375 = vld [vmem:[%s212 + $0x50] sm:$0xff]
      %v376 = vld [vmem:[%s212 + $0x58] sm:$0xff]
      %v377 = vld [vmem:[%s212 + $0x60] sm:$0xff]
      %v378 = vld [vmem:[%s212 + $0x68] sm:$0xff]
      %v379 = vld [vmem:[%s212 + $0x70] sm:$0xff]
      %v380 = vld [vmem:[%s212 + $0x78] sm:$0xff]
      %v381 = vld [vmem:[%s212 + $0x80] sm:$0xff]
      %v382 = vld [vmem:[%s212 + $0x88] sm:$0xff]
      %v383 = vld [vmem:[%s212 + $0x90] sm:$0xff]
      %v384 = vld [vmem:[%s212 + $0x98] sm:$0xff]
      %v385 = vld [vmem:[%s212 + $0xa0] sm:$0xff]
      %v386 = vld [vmem:[%s212 + $0xa8] sm:$0xff]
      %v387 = vld [vmem:[%s212 + $0xb0] sm:$0xff]
      %v388 = vld [vmem:[%s212 + $0xb8] sm:$0xff]
      %v389 = vld [vmem:[%s212 + $0xc0] sm:$0xff]
      %v390 = vld [vmem:[%s212 + $0xc8] sm:$0xff]
      %v391 = vld [vmem:[%s212 + $0xd0] sm:$0xff]
      %v392 = vld [vmem:[%s212 + $0xd8] sm:$0xff]
      %v393 = vld [vmem:[%s212 + $0xe0] sm:$0xff]
      %v394 = vld [vmem:[%s212 + $0xe8] sm:$0xff]
      %v395 = vld [vmem:[%s212 + $0xf0] sm:$0xff]
      %v396 = vld [vmem:[%s212 + $0xf8] sm:$0xff]
      %v397 = vperm.slane %v364, 0
      %v398 = vmul.f32 %v397, %v218
      %v399 = vmul.f32 %v397, %v219
      %v400 = vmul.f32 %v397, %v220
      %v401 = vmul.f32 %v397, %v221
      %v402 = vmul.f32 %v397, %v222
      %v403 = vmul.f32 %v397, %v223
      %v404 = vmul.f32 %v397, %v224
      %v405 = vmul.f32 %v397, %v225
      %v406 = vmul.f32 %v397, %v226
      %v407 = vmul.f32 %v397, %v227
      %v408 = vmul.f32 %v397, %v228
      %v409 = vmul.f32 %v397, %v229
      %v410 = vmul.f32 %v397, %v230
      %v411 = vmul.f32 %v397, %v231
      %v412 = vmul.f32 %v397, %v232
      %v413 = vmul.f32 %v397, %v233
      %v414 = vmul.f32 %v397, %v234
      %v415 = vmul.f32 %v397, %v235
      %v416 = vmul.f32 %v397, %v236
      %v417 = vmul.f32 %v397, %v237
      %v418 = vmul.f32 %v397, %v238
      %v419 = vmul.f32 %v397, %v239
      %v420 = vmul.f32 %v397, %v240
      %v421 = vmul.f32 %v397, %v241
      %v422 = vmul.f32 %v397, %v242
      %v423 = vmul.f32 %v397, %v243
      %v424 = vmul.f32 %v397, %v244
      %v425 = vmul.f32 %v397, %v245
      %v426 = vmul.f32 %v397, %v246
      %v427 = vmul.f32 %v397, %v247
      %v428 = vmul.f32 %v397, %v248
      %v429 = vmul.f32 %v397, %v249
      %v430 = vadd.f32 %v365, %v398
      %v431 = vadd.f32 %v366, %v399
      %v432 = vadd.f32 %v367, %v400
      %v433 = vadd.f32 %v368, %v401
      %v434 = vadd.f32 %v369, %v402
      %v435 = vadd.f32 %v370, %v403
      %v436 = vadd.f32 %v371, %v404
      %v437 = vadd.f32 %v372, %v405
      %v438 = vadd.f32 %v373, %v406
      %v439 = vadd.f32 %v374, %v407
      %v440 = vadd.f32 %v375, %v408
      %v441 = vadd.f32 %v376, %v409
      %v442 = vadd.f32 %v377, %v410
      %v443 = vadd.f32 %v378, %v411
      %v444 = vadd.f32 %v379, %v412
      %v445 = vadd.f32 %v380, %v413
      %v446 = vadd.f32 %v381, %v414
      %v447 = vadd.f32 %v382, %v415
      %v448 = vadd.f32 %v383, %v416
      %v449 = vadd.f32 %v384, %v417
      %v450 = vadd.f32 %v385, %v418
      %v451 = vadd.f32 %v386, %v419
      %v452 = vadd.f32 %v387, %v420
      %v453 = vadd.f32 %v388, %v421
      %v454 = vadd.f32 %v389, %v422
      %v455 = vadd.f32 %v390, %v423
      %v456 = vadd.f32 %v391, %v424
      %v457 = vadd.f32 %v392, %v425
      %v458 = vadd.f32 %v393, %v426
      %v459 = vadd.f32 %v394, %v427
      %v460 = vadd.f32 %v395, %v428
      %v461 = vadd.f32 %v396, %v429
      %462 = vst.msk [vmem:[%s217] sm:$0xff] %vm292, %v430
      %463 = vst.msk [vmem:[%s217 + $0x8] sm:$0xff] %vm292, %v431
      %464 = vst.msk [vmem:[%s217 + $0x10] sm:$0xff] %vm292, %v432
      %465 = vst.msk [vmem:[%s217 + $0x18] sm:$0xff] %vm292, %v433
      %466 = vst.msk [vmem:[%s217 + $0x20] sm:$0xff] %vm292, %v434
      %467 = vst.msk [vmem:[%s217 + $0x28] sm:$0xff] %vm292, %v435
      %468 = vst.msk [vmem:[%s217 + $0x30] sm:$0xff] %vm292, %v436
      %469 = vst.msk [vmem:[%s217 + $0x38] sm:$0xff] %vm292, %v437
      %470 = vst.msk [vmem:[%s217 + $0x40] sm:$0xff] %vm292, %v438
      %471 = vst.msk [vmem:[%s217 + $0x48] sm:$0xff] %vm292, %v439
      %472 = vst.msk [vmem:[%s217 + $0x50] sm:$0xff] %vm292, %v440
      %473 = vst.msk [vmem:[%s217 + $0x58] sm:$0xff] %vm292, %v441
      %474 = vst.msk [vmem:[%s217 + $0x60] sm:$0xff] %vm292, %v442
      %475 = vst.msk [vmem:[%s217 + $0x68] sm:$0xff] %vm292, %v443
      %476 = vst.msk [vmem:[%s217 + $0x70] sm:$0xff] %vm292, %v444
      %477 = vst.msk [vmem:[%s217 + $0x78] sm:$0xff] %vm292, %v445
      %478 = vst.msk [vmem:[%s217 + $0x80] sm:$0xff] %vm292, %v446
      %479 = vst.msk [vmem:[%s217 + $0x88] sm:$0xff] %vm292, %v447
      %480 = vst.msk [vmem:[%s217 + $0x90] sm:$0xff] %vm292, %v448
      %481 = vst.msk [vmem:[%s217 + $0x98] sm:$0xff] %vm292, %v449
      %482 = vst.msk [vmem:[%s217 + $0xa0] sm:$0xff] %vm292, %v450
      %483 = vst.msk [vmem:[%s217 + $0xa8] sm:$0xff] %vm292, %v451
      %484 = vst.msk [vmem:[%s217 + $0xb0] sm:$0xff] %vm292, %v452
      %485 = vst.msk [vmem:[%s217 + $0xb8] sm:$0xff] %vm292, %v453
      %486 = vst.msk [vmem:[%s217 + $0xc0] sm:$0xff] %vm292, %v454
      %487 = vst.msk [vmem:[%s217 + $0xc8] sm:$0xff] %vm292, %v455
      %488 = vst.msk [vmem:[%s217 + $0xd0] sm:$0xff] %vm292, %v456
      %489 = vst.msk [vmem:[%s217 + $0xd8] sm:$0xff] %vm292, %v457
      %490 = vst.msk [vmem:[%s217 + $0xe0] sm:$0xff] %vm292, %v458
      %491 = vst.msk [vmem:[%s217 + $0xe8] sm:$0xff] %vm292, %v459
      %492 = vst.msk [vmem:[%s217 + $0xf0] sm:$0xff] %vm292, %v460
      %493 = vst.msk [vmem:[%s217 + $0xf8] sm:$0xff] %vm292, %v461
      %p494 = scmp.lt.s32.totalorder %s15, 1
      %s495 = scalar_select %p494, %s15, 1
      %s496 = smul.addr %s495, 32
      %s497 = smul.addr %s496, 8
      %s498 = scalar_lea.vmem %s4, %s497
      // Predicated region
      $region37: #{meta_ms_forward.5} parent=35 // pred_check
        %p499 = pneg %p127
      $region38: #{meta_ms_forward.5} parent=35 // pred_check_branch
        %501 = sbr.rel (%p499) target = $region40
      $region39: #{meta_ms_forward.5} parent=35 // pred_region
        _
      $region40: #{meta_ms_forward.5} parent=35 // pred_fallthru
        _
    $region36: #{meta_ms_forward.5} parent=5 // pred_fallthru
      _
    %p502 = scmp.le.s32.totalorder 2, %s10
    // Predicated region
    $region41: #{meta_ms_forward.5} parent=5 // pred_check
      %p503 = pneg %p502
    $region42: #{meta_ms_forward.5} parent=5 // pred_check_branch
      %505 = sbr.rel (%p503) target = $region44
    $region43: #{meta_ms_forward.5} parent=5 // pred_region
      %s506 = ssub.s32 %s10, 2
      // Predicated region
      $region45: #{meta_ms_forward.5} parent=43 // pred_check
        %p507 = pneg %p133
      $region46: #{meta_ms_forward.5} parent=43 // pred_check_branch
        %509 = sbr.rel (%p507) target = $region48
      $region47: #{meta_ms_forward.5} parent=43 // pred_region
        %p510 = scmp.lt.s32.totalorder %s16, 1
        %s511 = scalar_select %p510, %s16, 1
        %s512 = smul.addr %s511, 32
        %s513 = smul.addr %s512, 8
        %s514 = scalar_lea.vmem %s4, %s513
      $region48: #{meta_ms_forward.5} parent=43 // pred_fallthru
        _
    $region44: #{meta_ms_forward.5} parent=5 // pred_fallthru
      _
  $region6: #{meta_ms_forward.5} parent=0 // loop_footer
    %s14 = sadd.s32 1, %s10
  $region7: #{meta_ms_forward.5} parent=0 // loop_footer_branch
    %9 = sbr.rel target = $region3
  $region8: #{meta_ms_forward.5} parent=0 // loop_exit
    _

</llo_original>
